<compile_context>
chip_gen: v7x
topology: tpu7x:2x2x1
jax: 0.10.0
libtpu: 0.0.40
codegen_flags: <defaults>
</compile_context>

<pallas_src>
import jax
import jax.numpy as jnp
from jax import lax
from jax.experimental import pallas as pl
from jax.experimental.pallas import tpu as pltpu


# ----------------------------------------------------------------------------
# VMEM sizing: default scoped limits (16 MiB v5e / 32 MiB v6e,v7x) are far below
# the physical capacity; raise them explicitly and derive tile defaults from the
# physical size (v7x has 64 MiB per TensorCore vs 128 MiB on v5e/v6e).
# ----------------------------------------------------------------------------
def _tpu_vmem_capacity_bytes() -> int:
    try:
        return int(pltpu.get_tpu_info().vmem_capacity_bytes)
    except Exception:
        return 64 * 1024 * 1024          # conservative (v7x-sized) fallback


_VMEM_PHYS = _tpu_vmem_capacity_bytes()
_VMEM_LIMIT = min(int(_VMEM_PHYS * 3 // 4), 96 * 1024 * 1024)   # ~25% headroom


def _pick_tile(total: int, target: int, multiple: int = 1) -> int:
    """Largest divisor of `total` <= target that is a multiple of `multiple`
    (falls back to `total`, always a legal block size).  NOTE: for awkward
    prime-ish sizes this silently degrades to a small tile; pad the input or
    pass an explicit tile instead of relying on the fallback."""
    for t in range(min(total, target), 0, -1):
        if total % t == 0 and t % multiple == 0:
            return t
    return total


# ----------------------------------------------------------------------------
# Kernel 1: fused temporal nearest-upsample + causal temporal conv (3 taps)
#           + bias + residual.
#   x      : (B, T, P, C)   channels-last, P = H*W
#   w1taps : (3, C, C)      w1taps[k, cin, cout]
#   b1     : (1, C)
#   out    : (B, To, P, C)  To = tf*T - (tf-1)
# ----------------------------------------------------------------------------
def _temporal_upsample_conv_residual(x, w1taps, b1, *, time_factor, tile_p):
    B, T, P, C = x.shape
    tf = int(time_factor)
    To = tf * T - (tf - 1)
    sub = 16 if x.dtype.itemsize < 4 else 8          # sublane packing
    TP = _pick_tile(P, tile_p, multiple=sub)
    # K >= 256 fills the v6e/v7x MXU: for C < 256 im2col the 3 taps along the
    # lane dim (one K=3C matmul); for C >= 256 three accumulating K=C matmuls
    # avoid the 3x-tile im2col copy (K=C already fills the array, v5e-friendly).
    use_im2col = C < 256

    def kernel(x_ref, w_ref, b_ref, o_ref):
        xt = x_ref[0]                                           # (T, TP, C)
        if tf == 2:
            # repeat_interleave(2) along T, drop the first frame -> 2T-1 frames,
            # built entirely in VMEM (no HBM round trip).
            xr = jnp.broadcast_to(
                xt[:, None], (T, 2, TP, C)).reshape(2 * T, TP, C)[1:]
        else:
            xr = xt
        # causal pad: replicate the first frame twice (temporal kernel = 3).
        xp = jnp.concatenate([xr[:1], xr[:1], xr], axis=0)      # (To+2, TP, C)
        if use_im2col:
            cols = jnp.concatenate(
                [xp[k:k + To].reshape(To * TP, C) for k in range(3)], axis=-1)
            acc = jnp.dot(cols, w_ref[...].reshape(3 * C, C),
                          preferred_element_type=jnp.float32)
        else:
            acc = jnp.dot(xp[0:To].reshape(To * TP, C), w_ref[0],
                          preferred_element_type=jnp.float32)
            acc = acc + jnp.dot(xp[1:To + 1].reshape(To * TP, C), w_ref[1],
                                preferred_element_type=jnp.float32)
            acc = acc + jnp.dot(xp[2:To + 2].reshape(To * TP, C), w_ref[2],
                                preferred_element_type=jnp.float32)
        # bias + residual (residual is the already-resident upsampled tile).
        acc = acc + b_ref[...].astype(jnp.float32) \
                  + xr.reshape(To * TP, C).astype(jnp.float32)
        o_ref[0] = acc.reshape(To, TP, C).astype(o_ref.dtype)

    return pl.pallas_call(
        kernel,
        out_shape=jax.ShapeDtypeStruct((B, To, P, C), x.dtype),
        grid=(B, P // TP),
        in_specs=[
            pl.BlockSpec((1, T, TP, C), lambda b, j: (b, 0, j, 0)),
            pl.BlockSpec((3, C, C), lambda b, j: (0, 0, 0)),    # resident weights
            pl.BlockSpec((1, C), lambda b, j: (0, 0)),          # resident bias
        ],
        out_specs=pl.BlockSpec((1, To, TP, C), lambda b, j: (b, 0, j, 0)),
        compiler_params=pltpu.CompilerParams(
            dimension_semantics=("parallel", "parallel"),
            vmem_limit_bytes=_VMEM_LIMIT),
    )(x, w1taps, b1)


# ----------------------------------------------------------------------------
# Sub-pixel phase folding of the 3x3 spatial kernel.
#
# nearest-2x upsample + zero-pad(1) + 3x3 conv  ==  4 phase outputs
#   out[2r+a, 2s+b] = sum_{p,q in {0,1}} Wfold[a,b,p,q] . y[r+dr(a,p), s+ds(b,q)]
# with dr(0,.)=(-1,0), dr(1,.)=(0,+1) (same groups along columns), and
#   Wfold[a,b,p,q] = sum_{dh in rowgrp(a,p), dw in colgrp(b,q)} w2k[dh, dw].
# Packed as (2, 2, 2, 2*Cin, Cout): [a, b, p] = concat_q(Wfold[a,b,p,q]) along K,
# matching the K=2C column im2col built inside the kernel.
# ----------------------------------------------------------------------------
def _fold_phase_weights(w2k):
    groups = (((0,), (1, 2)),        # phase 0: taps at offsets (-1, 0)
              ((0, 1), (2,)))        # phase 1: taps at offsets (0, +1)
    a_blocks = []
    for a in range(2):
        b_blocks = []
        for b in range(2):
            p_blocks = []
            for p in range(2):
                q_blocks = []
                for q in range(2):
                    w = None
                    for dh in groups[a][p]:
                        for dw in groups[b][q]:
                            w = w2k[dh, dw] if w is None else w + w2k[dh, dw]
                    q_blocks.append(w)
                p_blocks.append(jnp.concatenate(q_blocks, axis=0))   # (2C, Co)
            b_blocks.append(jnp.stack(p_blocks, axis=0))             # (2, 2C, Co)
        a_blocks.append(jnp.stack(b_blocks, axis=0))                 # (2, 2, 2C, Co)
    return jnp.stack(a_blocks, axis=0)                               # (2,2,2,2C,Co)


# ----------------------------------------------------------------------------
# Kernel 2: fused nearest 2x spatial upsample + zero-pad(1) + 3x3 conv + bias
#           + residual + 1x1x1 conv (+ bias), via the phase decomposition.
#   y   : (N, H, W, C)  pre-upsample frames (N = B*T')
#   w2k : (3, 3, C, C)  w2k[dh, dw, cin, cout]
#   b2, b3 : (1, C)
#   w3k : (C, C)        w3k[cin, cout]
#   out : (N, 2H, 2W, C)
# ----------------------------------------------------------------------------
def _spatial_upsample_conv_pointwise(y, w2k, b2, w3k, b3, *, tile_h=8):
    N, H, W, C = y.shape
    TH = _pick_tile(H, tile_h)          # pre-upsample rows per tile
    n_tiles = H // TH
    w2f = _fold_phase_weights(w2k)      # (2, 2, 2, 2C, C)

    # For large C the 16*C^2 folded weights are MiB-scale; don't double-buffer
    # these constant-index blocks (v7x has only 64 MiB VMEM for data + weights).
    resident_kwargs = dict(pipeline_mode=pl.Buffered(1)) if C >= 512 else {}

    def kernel(y_ref, top_ref, bot_ref, w2_ref, b2_ref, w3_ref, b3_ref, o_ref):
        i = pl.program_id(1)
        last = pl.num_programs(1) - 1

        yt = y_ref[0]                              # (TH, W, C)
        top = top_ref[0, 0]                        # (W, C)  row above (clamped)
        bot = bot_ref[0, 0]                        # (W, C)  row below (clamped)
        # zero-pad semantics at the frame boundary (halo index_maps are clamped).
        top = top * (i > 0).astype(top.dtype)
        bot = bot * (i < last).astype(bot.dtype)

        rows = jnp.concatenate([top[None], yt, bot[None]], axis=0)  # (TH+2, W, C)
        zc = jnp.zeros((TH + 2, 1, C), rows.dtype)
        left = jnp.concatenate([zc, rows[:, :W - 1]], axis=1)       # value at s-1
        right = jnp.concatenate([rows[:, 1:], zc], axis=1)          # value at s+1
        # column im2col (K = 2C): b=0 -> taps {s-1, s}; b=1 -> taps {s, s+1}.
        cb = (jnp.concatenate([left, rows], axis=-1),               # (TH+2, W, 2C)
              jnp.concatenate([rows, right], axis=-1))

        bias2 = b2_ref[...].astype(jnp.float32)
        bias3 = b3_ref[...].astype(jnp.float32)
        res = yt.reshape(TH * W, C).astype(jnp.float32)  # residual == upsampled val
        w3 = w3_ref[...]

        def phase(a, b):
            # Two K=2C matmuls (row taps), summed in registers — no scratch RMW.
            s0 = cb[b][a:a + TH].reshape(TH * W, 2 * C)
            s1 = cb[b][a + 1:a + 1 + TH].reshape(TH * W, 2 * C)
            g = jnp.dot(s0, w2_ref[a, b, 0], preferred_element_type=jnp.float32)
            g = g + jnp.dot(s1, w2_ref[a, b, 1], preferred_element_type=jnp.float32)
            g = g + bias2 + res
            # Fast path: fused 1x1x1 conv3 in model dtype (exact for f32 models;
            # documented deviation from f32/HIGHEST for bf16 models).
            h = g.astype(yt.dtype)
            o = jnp.dot(h, w3, preferred_element_type=jnp.float32) + bias3
            return o.astype(o_ref.dtype).reshape(TH, W, C)

        p00, p01 = phase(0, 0), phase(0, 1)
        p10, p11 = phase(1, 0), phase(1, 1)

        # Single 2x2 interleave of the native-dtype phase outputs, then ONE
        # dense store:  out[2r+a, 2s+b] = p_ab[r, s].
        def col_interleave(pa0, pa1):
            d0 = jnp.broadcast_to(pa0[:, :, None, :],
                                  (TH, W, 2, C)).reshape(TH, 2 * W, C)
            d1 = jnp.broadcast_to(pa1[:, :, None, :],
                                  (TH, W, 2, C)).reshape(TH, 2 * W, C)
            col = lax.broadcasted_iota(jnp.int32, (TH, 2 * W, C), 1)
            return jnp.where((col & 1) == 0, d0, d1)

        r0 = col_interleave(p00, p01)              # (TH, 2W, C)  a = 0 rows
        r1 = col_interleave(p10, p11)              # (TH, 2W, C)  a = 1 rows
        d0 = jnp.broadcast_to(r0[:, None], (TH, 2, 2 * W, C)).reshape(
            2 * TH, 2 * W, C)
        d1 = jnp.broadcast_to(r1[:, None], (TH, 2, 2 * W, C)).reshape(
            2 * TH, 2 * W, C)
        rowi = lax.broadcasted_iota(jnp.int32, (2 * TH, 2 * W, C), 0)
        o_ref[0] = jnp.where((rowi & 1) == 0, d0, d1)

    # NOTE(v7x megacore): the leading grid axis N = B*T' is the one Mosaic
    # shards across the two TensorCores; keep it the larger / even extent.
    return pl.pallas_call(
        kernel,
        out_shape=jax.ShapeDtypeStruct((N, 2 * H, 2 * W, C), y.dtype),
        grid=(N, n_tiles),
        in_specs=[
            # main row-tile
            pl.BlockSpec((1, TH, W, C), lambda n, i: (n, i, 0, 0)),
            # 1-row halos: block size 1 along H => block index == row index;
            # clamped at the frame edge and zero-masked inside the kernel.
            pl.BlockSpec((1, 1, W, C),
                         lambda n, i: (n, jnp.maximum(i * TH - 1, 0), 0, 0)),
            pl.BlockSpec((1, 1, W, C),
                         lambda n, i: (n, jnp.minimum(i * TH + TH, H - 1), 0, 0)),
            pl.BlockSpec((2, 2, 2, 2 * C, C),
                         lambda n, i: (0, 0, 0, 0, 0), **resident_kwargs),
            pl.BlockSpec((1, C), lambda n, i: (0, 0)),
            pl.BlockSpec((C, C), lambda n, i: (0, 0), **resident_kwargs),
            pl.BlockSpec((1, C), lambda n, i: (0, 0)),
        ],
        out_specs=pl.BlockSpec((1, 2 * TH, 2 * W, C), lambda n, i: (n, i, 0, 0)),
        compiler_params=pltpu.CompilerParams(
            dimension_semantics=("parallel", "parallel"),
            vmem_limit_bytes=_VMEM_LIMIT),
    )(y, y, y, w2f, b2, w3k, b3)


# ----------------------------------------------------------------------------
# Kernel 3: standalone 1x1x1 conv (only used when spatial_upsample=False;
#           otherwise fused into kernel 2's epilogue).  Purely HBM-bound:
#           flat (rows, C) layout, 1-D grid of large lane/sublane-dense blocks.
# ----------------------------------------------------------------------------
def _pointwise_conv(z2d, w3k, b3, *, tile_rows=1024):
    R, C = z2d.shape
    sub = 16 if z2d.dtype.itemsize < 4 else 8
    TR = _pick_tile(R, tile_rows, multiple=sub)

    def kernel(z_ref, w_ref, b_ref, o_ref):
        val = jnp.dot(z_ref[...], w_ref[...], preferred_element_type=jnp.float32)
        o_ref[...] = (val + b_ref[...].astype(jnp.float32)).astype(o_ref.dtype)

    return pl.pallas_call(
        kernel,
        out_shape=jax.ShapeDtypeStruct((R, C), z2d.dtype),
        grid=(R // TR,),
        in_specs=[
            pl.BlockSpec((TR, C), lambda r: (r, 0)),
            pl.BlockSpec((C, C), lambda r: (0, 0)),
            pl.BlockSpec((1, C), lambda r: (0, 0)),
        ],
        out_specs=pl.BlockSpec((TR, C), lambda r: (r, 0)),
        compiler_params=pltpu.CompilerParams(
            dimension_semantics=("parallel",),
            vmem_limit_bytes=_VMEM_LIMIT),
    )(z2d, w3k, b3)


# ----------------------------------------------------------------------------
# Channels-last forward (preferred entry point — no layout transposes).
#   x: (B, T, H, W, C) -> (B, T', H', W', C)
# ----------------------------------------------------------------------------
def cosmos_upsample3d_forward_channels_last(x, params, *, spatial_upsample=True,
                                            temporal_upsample=True,
                                            tile_h=8, tile_p=None,
                                            tile_rows=1024):
    if not spatial_upsample and not temporal_upsample:
        return x
    B, T, H, W, C = x.shape
    if tile_p is None:
        # v7x (64 MiB VMEM / TC) wants smaller mem-bound tiles than v5e/v6e.
        tile_p = 256 if _VMEM_PHYS <= 64 * 1024 * 1024 else 512

    if temporal_upsample:
        tf = 2 if T > 1 else 1
        xt = _temporal_upsample_conv_residual(
            x.reshape(B, T, H * W, C), params["w1"], params["b1"],
            time_factor=tf, tile_p=tile_p)
        T = xt.shape[1]
        x = xt.reshape(B, T, H, W, C)

    if spatial_upsample:
        y = _spatial_upsample_conv_pointwise(
            x.reshape(B * T, H, W, C), params["w2"], params["b2"],
            params["w3"], params["b3"], tile_h=tile_h)
        x = y.reshape(B, T, 2 * H, 2 * W, C)
    else:
        z = _pointwise_conv(x.reshape(B * T * H * W, C),
                            params["w3"], params["b3"], tile_rows=tile_rows)
        x = z.reshape(B, T, H, W, C)
    return x


# ----------------------------------------------------------------------------
# PyTorch-layout wrapper: (B, C, T, H, W) -> (B, C, T', H', W').
# The two transposes are full HBM passes; call the channels-last entry point
# directly whenever the surrounding graph allows it.
# ----------------------------------------------------------------------------
def cosmos_upsample3d_forward(x_ncthw, params, *, spatial_upsample=True,
                              temporal_upsample=True, tile_h=8, tile_p=None,
                              tile_rows=1024):
    if not spatial_upsample and not temporal_upsample:
        return x_ncthw
    x = jnp.transpose(x_ncthw, (0, 2, 3, 4, 1))
    x = cosmos_upsample3d_forward_channels_last(
        x, params, spatial_upsample=spatial_upsample,
        temporal_upsample=temporal_upsample, tile_h=tile_h, tile_p=tile_p,
        tile_rows=tile_rows)
    return jnp.transpose(x, (0, 4, 1, 2, 3))


# ----------------------------------------------------------------------------
# Pure-JAX reference (mirrors the PyTorch module with lax.conv_general_dilated).
# ----------------------------------------------------------------------------
def _ref_forward(x, w1, b1, w2, b2, w3, b3, *, spatial=True, temporal=True):
    prec = lax.Precision.HIGHEST
    dn = ("NCDHW", "OIDHW", "NCDHW")
    if not spatial and not temporal:
        return x
    if temporal:
        T = x.shape[2]
        tf = 2 if T > 1 else 1
        x = jnp.repeat(x, tf, axis=2)[:, :, tf - 1:]
        xp = jnp.concatenate([jnp.repeat(x[:, :, :1], 2, axis=2), x], axis=2)
        h = lax.conv_general_dilated(xp, w1, (1, 1, 1), "VALID",
                                     dimension_numbers=dn, precision=prec)
        x = h + b1[None, :, None, None, None] + x
    if spatial:
        x = jnp.repeat(jnp.repeat(x, 2, axis=3), 2, axis=4)
        xp = jnp.pad(x, ((0, 0), (0, 0), (0, 0), (1, 1), (1, 1)))
        g = lax.conv_general_dilated(xp, w2, (1, 1, 1), "VALID",
                                     dimension_numbers=dn, precision=prec)
        x = g + b2[None, :, None, None, None] + x
    o = lax.conv_general_dilated(x, w3, (1, 1, 1), "VALID",
                                 dimension_numbers=dn, precision=prec)
    return o + b3[None, :, None, None, None]


if __name__ == "__main__":
    key = jax.random.PRNGKey(0)
    # Small but representative: C=128 keeps the lane dim dense; H=W=16 with
    # tile_h=8 exercises the halo / boundary-mask path (2 row-tiles per frame).
    B, C, T, H, W = 2, 128, 3, 16, 16

    keys = jax.random.split(key, 7)
    x = jax.random.normal(keys[0], (B, C, T, H, W), jnp.float32)

    # Synthetic parameters in PyTorch Conv3d weight layouts.
    w1 = jax.random.normal(keys[1], (C, C, 3, 1, 1), jnp.float32) * 0.05
    b1 = jax.random.normal(keys[2], (C,), jnp.float32) * 0.1
    w2 = jax.random.normal(keys[3], (C, C, 1, 3, 3), jnp.float32) * 0.05
    b2 = jax.random.normal(keys[4], (C,), jnp.float32) * 0.1
    w3 = jax.random.normal(keys[5], (C, C, 1, 1, 1), jnp.float32) * 0.05
    b3 = jax.random.normal(keys[6], (C,), jnp.float32) * 0.1

    params = {
        # conv1 (3,1,1): (Co,Ci,3,1,1) -> (k, Ci, Co)
        "w1": jnp.transpose(w1[:, :, :, 0, 0], (2, 1, 0)),
        "b1": b1.reshape(1, C),
        # conv2 (1,3,3): (Co,Ci,1,3,3) -> (dh, dw, Ci, Co)
        "w2": jnp.transpose(w2[:, :, 0], (2, 3, 1, 0)),
        "b2": b2.reshape(1, C),
        # conv3 (1,1,1): (Co,Ci,1,1,1) -> (Ci, Co)
        "w3": jnp.transpose(w3[:, :, 0, 0, 0], (1, 0)),
        "b3": b3.reshape(1, C),
    }

    # Full path: temporal + spatial upsample (kernels 1 and 2, incl. halos).
    out = jax.block_until_ready(
        cosmos_upsample3d_forward(x, params, tile_h=8, tile_p=128))
    ref = jax.block_until_ready(_ref_forward(x, w1, b1, w2, b2, w3, b3))
    assert out.shape == ref.shape, (out.shape, ref.shape)
    max_err = float(jnp.max(jnp.abs(out - ref)))
    assert jnp.allclose(out, ref, atol=1e-3, rtol=1e-3), max_err

    # Temporal-only path (exercises the standalone pointwise kernel 3).
    out_t = jax.block_until_ready(
        cosmos_upsample3d_forward(x, params, spatial_upsample=False))
    ref_t = jax.block_until_ready(
        _ref_forward(x, w1, b1, w2, b2, w3, b3, spatial=False))
    assert out_t.shape == ref_t.shape, (out_t.shape, ref_t.shape)
    max_err_t = float(jnp.max(jnp.abs(out_t - ref_t)))
    assert jnp.allclose(out_t, ref_t, atol=1e-3, rtol=1e-3), max_err_t

    print("KERNEL_OK")
</pallas_src>

<mosaic_0001>
module attributes {stable_mosaic.version = 11 : i64} {
  func.func @kernel(%arg0: i32, %arg1: i32, %arg2: memref<1x3x128x128xf32, #tpu.memory_space<vmem>>, %arg3: memref<3x128x128xf32, #tpu.memory_space<vmem>>, %arg4: memref<1x128xf32, #tpu.memory_space<vmem>>, %arg5: memref<1x5x128x128xf32, #tpu.memory_space<vmem>>) attributes {dimension_semantics = [#tpu.dimension_semantics<parallel>, #tpu.dimension_semantics<parallel>], iteration_bounds = array<i64: 2, 2>, scalar_prefetch = 0 : i64, scratch_operands = 0 : i64, tpu.core_type = #tpu.core_type<tc>, window_params = [{transform_indices = @transform_0, window_bounds = array<i64: 1, 3, 128, 128>}, {pipeline_mode = #tpu.pipeline_mode<synchronous>, transform_indices = @transform_1, window_bounds = array<i64: 3, 128, 128>}, {pipeline_mode = #tpu.pipeline_mode<synchronous>, transform_indices = @transform_2, window_bounds = array<i64: 1, 128>}, {transform_indices = @transform_3, window_bounds = array<i64: 1, 5, 128, 128>}]} {
    %c0 = arith.constant 0 : index
    %c0_0 = arith.constant 0 : index
    %c0_1 = arith.constant 0 : index
    %c0_2 = arith.constant 0 : index
    %0 = vector.load %arg2[%c0, %c0_0, %c0_1, %c0_2] : memref<1x3x128x128xf32, #tpu.memory_space<vmem>>, vector<1x3x128x128xf32>
    %1 = vector.shape_cast %0 : vector<1x3x128x128xf32> to vector<3x128x128xf32>
    %2 = vector.shape_cast %1 : vector<3x128x128xf32> to vector<3x1x128x128xf32>
    %3 = vector.shape_cast %2 : vector<3x1x128x128xf32> to vector<3x1x128x128xf32>
    %4 = vector.broadcast %3 : vector<3x1x128x128xf32> to vector<3x2x128x128xf32>
    %5 = vector.shape_cast %4 : vector<3x2x128x128xf32> to vector<6x128x128xf32>
    %6 = vector.extract_strided_slice %5 {offsets = [1, 0, 0], sizes = [5, 128, 128], strides = [1, 1, 1]} : vector<6x128x128xf32> to vector<5x128x128xf32>
    %7 = vector.extract_strided_slice %6 {offsets = [0, 0, 0], sizes = [1, 128, 128], strides = [1, 1, 1]} : vector<5x128x128xf32> to vector<1x128x128xf32>
    %8 = vector.extract_strided_slice %6 {offsets = [0, 0, 0], sizes = [1, 128, 128], strides = [1, 1, 1]} : vector<5x128x128xf32> to vector<1x128x128xf32>
    %9 = tpu.concatenate %7, %8, %6 in 0 : vector<1x128x128xf32>, vector<1x128x128xf32>, vector<5x128x128xf32> -> vector<7x128x128xf32>
    %10 = vector.extract_strided_slice %9 {offsets = [0, 0, 0], sizes = [5, 128, 128], strides = [1, 1, 1]} : vector<7x128x128xf32> to vector<5x128x128xf32>
    %11 = vector.shape_cast %10 : vector<5x128x128xf32> to vector<640x128xf32>
    %12 = vector.extract_strided_slice %9 {offsets = [1, 0, 0], sizes = [5, 128, 128], strides = [1, 1, 1]} : vector<7x128x128xf32> to vector<5x128x128xf32>
    %13 = vector.shape_cast %12 : vector<5x128x128xf32> to vector<640x128xf32>
    %14 = vector.extract_strided_slice %9 {offsets = [2, 0, 0], sizes = [5, 128, 128], strides = [1, 1, 1]} : vector<7x128x128xf32> to vector<5x128x128xf32>
    %15 = vector.shape_cast %14 : vector<5x128x128xf32> to vector<640x128xf32>
    %16 = tpu.concatenate %11, %13, %15 in 1 : vector<640x128xf32>, vector<640x128xf32>, vector<640x128xf32> -> vector<640x384xf32>
    %c0_3 = arith.constant 0 : index
    %c0_4 = arith.constant 0 : index
    %c0_5 = arith.constant 0 : index
    %17 = vector.load %arg3[%c0_3, %c0_4, %c0_5] : memref<3x128x128xf32, #tpu.memory_space<vmem>>, vector<3x128x128xf32>
    %18 = vector.shape_cast %17 : vector<3x128x128xf32> to vector<384x128xf32>
    %cst = arith.constant dense<0.000000e+00> : vector<640x128xf32>
    %19 = tpu.matmul %16, %18, %cst {dimension_numbers = #tpu.dot_dimension_numbers<[1], [0], [0], [1], [0, 0, 1, 1], [], []>} : vector<640x384xf32>, vector<384x128xf32>, vector<640x128xf32> -> vector<640x128xf32>
    %c0_6 = arith.constant 0 : index
    %c0_7 = arith.constant 0 : index
    %20 = vector.load %arg4[%c0_6, %c0_7] : memref<1x128xf32, #tpu.memory_space<vmem>>, vector<1x128xf32>
    %21 = vector.broadcast %20 : vector<1x128xf32> to vector<640x128xf32>
    %22 = arith.addf %19, %21 : vector<640x128xf32>
    %23 = vector.shape_cast %6 : vector<5x128x128xf32> to vector<640x128xf32>
    %24 = arith.addf %22, %23 : vector<640x128xf32>
    %25 = vector.shape_cast %24 : vector<640x128xf32> to vector<5x128x128xf32>
    %c0_8 = arith.constant 0 : index
    %c0_9 = arith.constant 0 : index
    %c0_10 = arith.constant 0 : index
    %c0_11 = arith.constant 0 : index
    %26 = vector.load %arg5[%c0_8, %c0_9, %c0_10, %c0_11] : memref<1x5x128x128xf32, #tpu.memory_space<vmem>>, vector<1x5x128x128xf32>
    %27 = vector.shape_cast %26 : vector<1x5x128x128xf32> to vector<5x128x128xf32>
    %28 = vector.shape_cast %25 : vector<5x128x128xf32> to vector<1x5x128x128xf32>
    tpu.vector_store %arg5[%c0_8, %c0_9, %c0_10, %c0_11], %28 {strides = array<i32>} : memref<1x5x128x128xf32, #tpu.memory_space<vmem>>, vector<1x5x128x128xf32>,
    return
  }
  func.func @transform_0(%arg0: i32, %arg1: i32) -> (i32, i32, i32, i32) {
    %c0_i32 = arith.constant 0 : i32
    %c0_i32_0 = arith.constant 0 : i32
    %c0_i32_1 = arith.constant 0 : i32
    return %arg0, %c0_i32, %arg1, %c0_i32_0 : i32, i32, i32, i32
  }
  func.func @transform_1(%arg0: i32, %arg1: i32) -> (i32, i32, i32) {
    %c0_i32 = arith.constant 0 : i32
    %c0_i32_0 = arith.constant 0 : i32
    %c0_i32_1 = arith.constant 0 : i32
    %c0_i32_2 = arith.constant 0 : i32
    return %c0_i32, %c0_i32_0, %c0_i32_1 : i32, i32, i32
  }
  func.func @transform_2(%arg0: i32, %arg1: i32) -> (i32, i32) {
    %c0_i32 = arith.constant 0 : i32
    %c0_i32_0 = arith.constant 0 : i32
    %c0_i32_1 = arith.constant 0 : i32
    return %c0_i32, %c0_i32_0 : i32, i32
  }
  func.func @transform_3(%arg0: i32, %arg1: i32) -> (i32, i32, i32, i32) {
    %c0_i32 = arith.constant 0 : i32
    %c0_i32_0 = arith.constant 0 : i32
    %c0_i32_1 = arith.constant 0 : i32
    return %arg0, %c0_i32, %arg1, %c0_i32_0 : i32, i32, i32, i32
  }
}

</mosaic_0001>

<llo_original>
// kernel: tpu_custom_call.1
$region0: #{tpu_custom_call.1}
  #allocation0 [shape = 'u32[]', space=smem, size = 0x4, offset = 0x4, fixed_abs, tag = 'smem constant byte address 0x4 - core index']
  #allocation1 [shape = 'u32[144,128]{1,0:T(1,128)}', space=vmem, size = 0x12000, scoped, tag = 'internal scratch']
  #allocation9 [shape = 's32[]', space=sflag, size = 0x4, offset = 0, fixed_abs, tag = 'sflag constant byte address 0x0 - dummy sync flag']
  #allocation11 [shape = 's32[]', space=sflag, size = 0x4, offset = 0, fixed_abs, tag = 'sflag constant byte address 0x0 - dummy sync flag']
  %s0 = inlined_call_operand.hbm [shape: f32[2,3,256,128], index: 0, kind: input, shape index: {}]
  %s1 = inlined_call_operand.hbm [shape: f32[3,128,128], index: 1, kind: input, shape index: {}]
  %s2 = inlined_call_operand.hbm [shape: f32[1,128], index: 2, kind: input, shape index: {}]
  %s3 = inlined_call_operand.hbm [shape: f32[2,5,256,128], index: 3, kind: output, shape index: {}]
  %s4 = sld [smem:[#allocation0]]
  $region57: #{tpu_custom_call.1} parent=0
    _
  %s6 = ssub.s32 1, %s4
  %s7 = scalar_select 0, %s6, %s4
  $region1: #{tpu_custom_call.1} parent=0
    #allocation2 [shape = 'u8[393216]{0}', space=vmem, size = 0x60000, scoped, tag = 'input window, operand 0']
    #allocation3 [shape = 's32[2]{0}', space=sflag, size = 0x8, scoped, tag = 'scoped memory for tpu_custom_call.1']
    #allocation4 [shape = 's32[2]{0}', space=sflag, size = 0x8, scoped, tag = 'scoped memory for tpu_custom_call.1']
    #allocation5 [shape = 'u8[196608]{0}', space=vmem, size = 0x30000, scoped, tag = 'input window, operand 1, single buffered']
    #allocation6 [shape = 's32[1]{0}', space=sflag, size = 0x4, scoped, tag = 'scoped memory for tpu_custom_call.1']
    #allocation7 [shape = 'u8[512]{0}', space=vmem, size = 0x400, scoped, tag = 'input window, operand 2, single buffered']
    #allocation8 [shape = 'u8[655360]{0}', space=vmem, size = 0xa0000, scoped, tag = 'output window, operand 0']
    %8 = vsyncpa [#allocation3], 0
    %s9 = scalar_lea.sflag [#allocation3], 1
    %10 = vsyncpa %s9, 0
    %11 = vsyncpa [#allocation6], 0
    %12 = vsyncpa [#allocation4], 0
    %s13 = scalar_lea.sflag [#allocation4], 1
    %14 = vsyncpa %s13, 0
    loop: start=0, step=1, limit=6
    $region2: #{tpu_custom_call.1} parent=1 // loop_pre_header
      _
    $region3: #{tpu_custom_call.1} parent=1 // loop_header
      %s16 = sphi 0, %s20
      %p17 = scmp.ge.s32.totalorder %s16, 6
      %s23 = sphi 0, %s35
      %s24 = sphi 0, %s31
      %s25 = sphi 0, %s23
      %s26 = sphi 0, %s24
      %s27 = sphi 0, %s25
      %s28 = sphi 0, %s26
      %s40 = sphi 0, %s42
      %s43 = sphi 0, %s40
      %s44 = sphi 0, %s43
      %s60 = sphi 0, %s44
      %s64 = sphi 0, %s64
      %s66 = sphi 0, %s64
      %s67 = sphi 0, %s66
      %s81 = sphi 0, %s67
      %s85 = sphi 0, %s85
      %s87 = sphi 0, %s85
      %s88 = sphi 0, %s87
      %s102 = sphi 0, %s88
      %s110 = sphi 0, %s112
      %s113 = sphi 0, %s110
      %s114 = sphi 0, %s113
      %s130 = sphi 0, %s114
    $region4: #{tpu_custom_call.1} parent=1 // loop_header_branch
      %19 = sbr.rel (%p17) target = $region8
    $region5: #{tpu_custom_call.1} parent=1 // loop_body
      %s21 = ssub.s32 %s16, 1
      %s22 = ssub.s32 %s16, 2
      %s29 = sadd.s32 1, %s24
      %p30 = scmp.ge.s32.totalorder %s29, 2
      %s31 = scalar_select %p30, 0, %s29
      %s32 = sadd.s32 1, %s23
      %s33 = scalar_select %p30, %s32, %s23
      %p34 = scmp.ge.s32.totalorder %s33, 2
      %s35 = scalar_select %p34, 0, %s33
      %s36 = ssub.s32 %s23, %s35
      %s37 = ssub.s32 %s24, %s31
      %s38 = sor.u32 %s36, %s37
      %p39 = scmp.eq.s32.totalorder %s38, 0
      %s41 = sadd.s32 %s40, 1
      %s42 = scalar_select %p39, %s40, %s41
      %p45 = pneg %p39
      %p46 = scmp.eq.s32.totalorder %s16, 3
      %p47 = por %p45, %p46
      %p48 = scmp.ne.s32.totalorder %s40, %s43
      %p49 = scmp.eq.s32.totalorder %s16, 0
      %p50 = por %p48, %p49
      %p51 = scmp.ne.s32.totalorder %s40, %s43
      %p52 = scmp.eq.s32.totalorder %s21, 3
      %p53 = por %p51, %p52
      %p54 = scmp.ne.s32.totalorder %s43, %s44
      %p55 = scmp.eq.s32.totalorder %s21, 0
      %p56 = por %p54, %p55
      %p57 = scmp.ne.s32.totalorder %s43, %s44
      %p58 = scmp.eq.s32.totalorder %s22, 3
      %p59 = por %p57, %p58
      %p61 = scmp.ne.s32.totalorder %s44, %s60
      %p62 = scmp.eq.s32.totalorder %s22, 0
      %p63 = por %p61, %p62
      %s65 = sadd.s32 %s64, 1
      %p68 = scmp.eq.s32.totalorder %s16, 3
      %p69 = scmp.ne.s32.totalorder %s64, %s66
      %p70 = scmp.eq.s32.totalorder %s16, 0
      %p71 = por %p69, %p70
      %p72 = scmp.ne.s32.totalorder %s64, %s66
      %p73 = scmp.eq.s32.totalorder %s21, 3
      %p74 = por %p72, %p73
      %p75 = scmp.ne.s32.totalorder %s66, %s67
      %p76 = scmp.eq.s32.totalorder %s21, 0
      %p77 = por %p75, %p76
      %p78 = scmp.ne.s32.totalorder %s66, %s67
      %p79 = scmp.eq.s32.totalorder %s22, 3
      %p80 = por %p78, %p79
      %p82 = scmp.ne.s32.totalorder %s67, %s81
      %p83 = scmp.eq.s32.totalorder %s22, 0
      %p84 = por %p82, %p83
      %s86 = sadd.s32 %s85, 1
      %p89 = scmp.eq.s32.totalorder %s16, 3
      %p90 = scmp.ne.s32.totalorder %s85, %s87
      %p91 = scmp.eq.s32.totalorder %s16, 0
      %p92 = por %p90, %p91
      %p93 = scmp.ne.s32.totalorder %s85, %s87
      %p94 = scmp.eq.s32.totalorder %s21, 3
      %p95 = por %p93, %p94
      %p96 = scmp.ne.s32.totalorder %s87, %s88
      %p97 = scmp.eq.s32.totalorder %s21, 0
      %p98 = por %p96, %p97
      %p99 = scmp.ne.s32.totalorder %s87, %s88
      %p100 = scmp.eq.s32.totalorder %s22, 3
      %p101 = por %p99, %p100
      %p103 = scmp.ne.s32.totalorder %s88, %s102
      %p104 = scmp.eq.s32.totalorder %s22, 0
      %p105 = por %p103, %p104
      %s106 = ssub.s32 %s23, %s35
      %s107 = ssub.s32 %s24, %s31
      %s108 = sor.u32 %s106, %s107
      %p109 = scmp.eq.s32.totalorder %s108, 0
      %s111 = sadd.s32 %s110, 1
      %s112 = scalar_select %p109, %s110, %s111
      %p115 = pneg %p109
      %p116 = scmp.eq.s32.totalorder %s16, 3
      %p117 = por %p115, %p116
      %p118 = scmp.ne.s32.totalorder %s110, %s113
      %p119 = scmp.eq.s32.totalorder %s16, 0
      %p120 = por %p118, %p119
      %p121 = scmp.ne.s32.totalorder %s110, %s113
      %p122 = scmp.eq.s32.totalorder %s21, 3
      %p123 = por %p121, %p122
      %p124 = scmp.ne.s32.totalorder %s113, %s114
      %p125 = scmp.eq.s32.totalorder %s21, 0
      %p126 = por %p124, %p125
      %p127 = scmp.ne.s32.totalorder %s113, %s114
      %p128 = scmp.eq.s32.totalorder %s22, 3
      %p129 = por %p127, %p128
      %p131 = scmp.ne.s32.totalorder %s114, %s130
      %p132 = scmp.eq.s32.totalorder %s22, 0
      %p133 = por %p131, %p132
      %p134 = scmp.le.s32.totalorder 1, %s16
      %p135 = scmp.lt.s32.totalorder %s16, 5
      %p136 = pnand %p134, %p135
      %p137 = pneg %p136
      // Predicated region
      $region9: #{tpu_custom_call.1} parent=5 // pred_check
        _
      $region10: #{tpu_custom_call.1} parent=5 // pred_check_branch
        %139 = sbr.rel (%p136) target = $region12
      $region11: #{tpu_custom_call.1} parent=5 // pred_region
        %s140 = ssub.s32 %s16, 1
        // Predicated region
        $region13: #{tpu_custom_call.1} parent=11 // pred_check
          %p141 = pneg %p77
        $region14: #{tpu_custom_call.1} parent=11 // pred_check_branch
          %143 = sbr.rel (%p141) target = $region16
        $region15: #{tpu_custom_call.1} parent=11 // pred_region
          %s145 = ssub.s32 6144, 6144
          %146 = vsyncadd [#allocation6], %s145
          %s147 = sshll.u32 [#allocation5], 4
          %s148 = int_to_ptr.vmem [resolvable:$true] %s147
          %153 = dma.hbm_to_vmem [thread:$0]  %s1, 6144, %s148, [#allocation6], 128, 128, 8
        $region16: #{tpu_custom_call.1} parent=11 // pred_fallthru
          _
        // Predicated region
        $region17: #{tpu_custom_call.1} parent=11 // pred_check
          %p154 = pneg %p98
        $region18: #{tpu_custom_call.1} parent=11 // pred_check_branch
          %156 = sbr.rel (%p154) target = $region20
        $region19: #{tpu_custom_call.1} parent=11 // pred_region
          %s158 = ssub.s32 16, 16
          %159 = vsyncadd [#allocation6], %s158
          %s161 = sshll.u32 [#allocation7], 4
          %s162 = int_to_ptr.vmem [resolvable:$true] %s161
          %164 = dma.hbm_to_vmem [thread:$0]  %s2, 16, %s162, [#allocation6]
        $region20: #{tpu_custom_call.1} parent=11 // pred_fallthru
          _
      $region12: #{tpu_custom_call.1} parent=5 // pred_fallthru
        _
      %p165 = scmp.lt.s32.totalorder %s16, 4
      // Predicated region
      $region21: #{tpu_custom_call.1} parent=5 // pred_check
        %p166 = pneg %p165
      $region22: #{tpu_custom_call.1} parent=5 // pred_check_branch
        %168 = sbr.rel (%p166) target = $region24
      $region23: #{tpu_custom_call.1} parent=5 // pred_region
        // Predicated region
        $region25: #{tpu_custom_call.1} parent=23 // pred_check
          %p169 = pneg %p50
        $region26: #{tpu_custom_call.1} parent=23 // pred_check_branch
          %171 = sbr.rel (%p169) target = $region28
        $region27: #{tpu_custom_call.1} parent=23 // pred_region
          #allocation10 [shape = 'u32[6]{0}', space=smem, size = 0x18, scoped, tag = 'DMA stride descriptor']
          %s172 = sand.u32 %s40, 1
          %s173 = scalar_lea.sflag [#allocation3], %s172
          %s174 = sand.u32 %s40, 1
          %s175 = smul.addr %s174, 384
          %s176 = scalar_lea.vmem [#allocation2], %s175
          %s177 = smul.u32 16, %s24
          %s179 = ssub.s32 6144, 6144
          %180 = vsyncadd %s173, %s179
          %s181 = smul.addr %s23, 96
          %s182 = sadd.s32 %s177, %s181
          %s183 = smul.addr %s182, 128
          %s184 = scalar_lea.hbm %s0, %s183
          %s186 = sshll.u32 1, 14
          %s187 = sxor.u32 4294967295, %s186
          %s189 = sld [smem:[#allocation0]]
          %s190 = sadd.s32 2, %s189
          %s192 = sshll.u32 7, 26
          %s193 = sxor.u32 4294967295, %s192
          %s194 = sand.u32 0, %s193
          %s195 = sshll.u32 %s190, 26
          %s196 = sor.u32 %s194, %s195
          %s197 = sshll.u32 %s176, 4
          %s198 = int_to_ptr.vmem [resolvable:$true] %s197
          %204 = sst [smem:[#allocation10]] 4096
          %s205 = scalar_lea.smem [#allocation10], 1
          %206 = sst [smem:[%s205]] 2048
          %s207 = scalar_lea.smem [#allocation10], 2
          %208 = sst [smem:[%s207]] 16
          %s209 = scalar_lea.smem [#allocation10], 3
          %210 = sst [smem:[%s209]] 128
          %s211 = scalar_lea.smem [#allocation10], 4
          %212 = sst [smem:[%s211]] 128
          %s213 = scalar_lea.smem [#allocation10], 5
          %214 = sst [smem:[%s213]] 8
          %216 = dma.general %s184, 6144, %s198, %s173, [#allocation9], [#allocation10], %s196, 0
        $region28: #{tpu_custom_call.1} parent=23 // pred_fallthru
          _
      $region24: #{tpu_custom_call.1} parent=5 // pred_fallthru
        _
      %p217 = scmp.le.s32.totalorder 1, %s16
      %p218 = scmp.lt.s32.totalorder %s16, 5
      %p219 = pnand %p217, %p218
      %p220 = pneg %p219
      // Predicated region
      $region29: #{tpu_custom_call.1} parent=5 // pred_check
        _
      $region30: #{tpu_custom_call.1} parent=5 // pred_check_branch
        %222 = sbr.rel (%p219) target = $region32
      $region31: #{tpu_custom_call.1} parent=5 // pred_region
        %s223 = ssub.s32 %s16, 1
        %s224 = sand.u32 %s43, 1
        %s225 = scalar_lea.sflag [#allocation3], %s224
        %s226 = sand.u32 %s43, 1
        %s227 = smul.addr %s226, 384
        %s228 = scalar_lea.vmem [#allocation2], %s227
        // Predicated region
        $region33: #{tpu_custom_call.1} parent=31 // pred_check
          %p229 = pneg %p56
        $region34: #{tpu_custom_call.1} parent=31 // pred_check_branch
          %231 = sbr.rel (%p229) target = $region36
        $region35: #{tpu_custom_call.1} parent=31 // pred_region
          %232 = dma.done %s225, 6144
        $region36: #{tpu_custom_call.1} parent=31 // pred_fallthru
          _
        // Predicated region
        $region37: #{tpu_custom_call.1} parent=31 // pred_check
          %p233 = pneg %p77
        $region38: #{tpu_custom_call.1} parent=31 // pred_check_branch
          %235 = sbr.rel (%p233) target = $region40
        $region39: #{tpu_custom_call.1} parent=31 // pred_region
          %236 = dma.done [#allocation6], 6144
        $region40: #{tpu_custom_call.1} parent=31 // pred_fallthru
          _
        // Predicated region
        $region41: #{tpu_custom_call.1} parent=31 // pred_check
          %p237 = pneg %p98
        $region42: #{tpu_custom_call.1} parent=31 // pred_check_branch
          %239 = sbr.rel (%p237) target = $region44
        $region43: #{tpu_custom_call.1} parent=31 // pred_region
          %240 = dma.done [#allocation6], 16
        $region44: #{tpu_custom_call.1} parent=31 // pred_fallthru
          _
        %s241 = sand.u32 %s43, 1
        %s242 = scalar_lea.sflag [#allocation3], %s241
        %s243 = sand.u32 %s43, 1
        %s244 = smul.addr %s243, 384
        %s245 = scalar_lea.vmem [#allocation2], %s244
        %p246 = pneg %p56
        %p247 = pneg %p53
        %p248 = pneg %p77
        %p249 = pneg %p74
        %p250 = pneg %p98
        %p251 = pneg %p95
        %p252 = pneg %p126
        %p253 = pneg %p123
        %s254 = sand.u32 %s113, 1
        %s255 = scalar_lea.sflag [#allocation4], %s254
        %s256 = sand.u32 %s113, 1
        %s257 = smul.addr %s256, 640
        %s258 = scalar_lea.vmem [#allocation8], %s257
        %s259 = smul.u32 16, %s26
        %s260 = smul.u32 16, %s26
        %v261 = vld [vmem:[%s228] sm:$0xff]
        %v262 = vld [vmem:[%s228 + $0x8] sm:$0xff]
        %v263 = vld [vmem:[%s228 + $0x10] sm:$0xff]
        %v264 = vld [vmem:[%s228 + $0x18] sm:$0xff]
        %v265 = vld [vmem:[%s228 + $0x20] sm:$0xff]
        %v266 = vld [vmem:[%s228 + $0x28] sm:$0xff]
        %v267 = vld [vmem:[%s228 + $0x30] sm:$0xff]
        %v268 = vld [vmem:[%s228 + $0x38] sm:$0xff]
        %v269 = vld [vmem:[%s228 + $0x40] sm:$0xff]
        %v270 = vld [vmem:[%s228 + $0x48] sm:$0xff]
        %v271 = vld [vmem:[%s228 + $0x50] sm:$0xff]
        %v272 = vld [vmem:[%s228 + $0x58] sm:$0xff]
        %v273 = vld [vmem:[%s228 + $0x60] sm:$0xff]
        %v274 = vld [vmem:[%s228 + $0x68] sm:$0xff]
        %v275 = vld [vmem:[%s228 + $0x70] sm:$0xff]
        %v276 = vld [vmem:[%s228 + $0x78] sm:$0xff]
        %v277 = vld [vmem:[%s228 + $0x80] sm:$0xff]
        %v278 = vld [vmem:[%s228 + $0x88] sm:$0xff]
        %v279 = vld [vmem:[%s228 + $0x90] sm:$0xff]
        %v280 = vld [vmem:[%s228 + $0x98] sm:$0xff]
        %v281 = vld [vmem:[%s228 + $0xa0] sm:$0xff]
        %v282 = vld [vmem:[%s228 + $0xa8] sm:$0xff]
        %v283 = vld [vmem:[%s228 + $0xb0] sm:$0xff]
        %v284 = vld [vmem:[%s228 + $0xb8] sm:$0xff]
        %v285 = vld [vmem:[%s228 + $0xc0] sm:$0xff]
        %v286 = vld [vmem:[%s228 + $0xc8] sm:$0xff]
        %v287 = vld [vmem:[%s228 + $0xd0] sm:$0xff]
        %v288 = vld [vmem:[%s228 + $0xd8] sm:$0xff]
        %v289 = vld [vmem:[%s228 + $0xe0] sm:$0xff]
        %v290 = vld [vmem:[%s228 + $0xe8] sm:$0xff]
        %v291 = vld [vmem:[%s228 + $0xf0] sm:$0xff]
        %v292 = vld [vmem:[%s228 + $0xf8] sm:$0xff]
        %v293 = vld [vmem:[%s228 + $0x100] sm:$0xff]
        %v294 = vld [vmem:[%s228 + $0x108] sm:$0xff]
        %v295 = vld [vmem:[%s228 + $0x110] sm:$0xff]
        %v296 = vld [vmem:[%s228 + $0x118] sm:$0xff]
        %v297 = vld [vmem:[%s228 + $0x120] sm:$0xff]
        %v298 = vld [vmem:[%s228 + $0x128] sm:$0xff]
        %v299 = vld [vmem:[%s228 + $0x130] sm:$0xff]
        %v300 = vld [vmem:[%s228 + $0x138] sm:$0xff]
        %v301 = vld [vmem:[%s228 + $0x140] sm:$0xff]
        %v302 = vld [vmem:[%s228 + $0x148] sm:$0xff]
        %v303 = vld [vmem:[%s228 + $0x150] sm:$0xff]
        %v304 = vld [vmem:[%s228 + $0x158] sm:$0xff]
        %v305 = vld [vmem:[%s228 + $0x160] sm:$0xff]
        %v306 = vld [vmem:[%s228 + $0x168] sm:$0xff]
        %v307 = vld [vmem:[%s228 + $0x170] sm:$0xff]
        %v308 = vld [vmem:[%s228 + $0x178] sm:$0xff]
        %v309 = vld [vmem:[#allocation5] sm:$0xff]
        %v310 = vld [vmem:[#allocation5 + $0x8] sm:$0xff]
        %v311 = vld [vmem:[#allocation5 + $0x10] sm:$0xff]
        %v312 = vld [vmem:[#allocation5 + $0x18] sm:$0xff]
        %v313 = vld [vmem:[#allocation5 + $0x20] sm:$0xff]
        %v314 = vld [vmem:[#allocation5 + $0x28] sm:$0xff]
        %v315 = vld [vmem:[#allocation5 + $0x30] sm:$0xff]
        %v316 = vld [vmem:[#allocation5 + $0x38] sm:$0xff]
        %v317 = vld [vmem:[#allocation5 + $0x40] sm:$0xff]
        %v318 = vld [vmem:[#allocation5 + $0x48] sm:$0xff]
        %v319 = vld [vmem:[#allocation5 + $0x50] sm:$0xff]
        %v320 = vld [vmem:[#allocation5 + $0x58] sm:$0xff]
        %v321 = vld [vmem:[#allocation5 + $0x60] sm:$0xff]
        %v322 = vld [vmem:[#allocation5 + $0x68] sm:$0xff]
        %v323 = vld [vmem:[#allocation5 + $0x70] sm:$0xff]
        %v324 = vld [vmem:[#allocation5 + $0x78] sm:$0xff]
        %v325 = vld [vmem:[#allocation5 + $0x80] sm:$0xff]
        %v326 = vld [vmem:[#allocation5 + $0x88] sm:$0xff]
        %v327 = vld [vmem:[#allocation5 + $0x90] sm:$0xff]
        %v328 = vld [vmem:[#allocation5 + $0x98] sm:$0xff]
        %v329 = vld [vmem:[#allocation5 + $0xa0] sm:$0xff]
        %v330 = vld [vmem:[#allocation5 + $0xa8] sm:$0xff]
        %v331 = vld [vmem:[#allocation5 + $0xb0] sm:$0xff]
        %v332 = vld [vmem:[#allocation5 + $0xb8] sm:$0xff]
        %v333 = vld [vmem:[#allocation5 + $0xc0] sm:$0xff]
        %v334 = vld [vmem:[#allocation5 + $0xc8] sm:$0xff]
        %v335 = vld [vmem:[#allocation5 + $0xd0] sm:$0xff]
        %v336 = vld [vmem:[#allocation5 + $0xd8] sm:$0xff]
        %v337 = vld [vmem:[#allocation5 + $0xe0] sm:$0xff]
        %v338 = vld [vmem:[#allocation5 + $0xe8] sm:$0xff]
        %v339 = vld [vmem:[#allocation5 + $0xf0] sm:$0xff]
        %v340 = vld [vmem:[#allocation5 + $0xf8] sm:$0xff]
        %v341 = vld [vmem:[#allocation5 + $0x100] sm:$0xff]
        %v342 = vld [vmem:[#allocation5 + $0x108] sm:$0xff]
        %v343 = vld [vmem:[#allocation5 + $0x110] sm:$0xff]
        %v344 = vld [vmem:[#allocation5 + $0x118] sm:$0xff]
        %v345 = vld [vmem:[#allocation5 + $0x120] sm:$0xff]
        %v346 = vld [vmem:[#allocation5 + $0x128] sm:$0xff]
        %v347 = vld [vmem:[#allocation5 + $0x130] sm:$0xff]
        %v348 = vld [vmem:[#allocation5 + $0x138] sm:$0xff]
        %v349 = vld [vmem:[#allocation5 + $0x140] sm:$0xff]
        %v350 = vld [vmem:[#allocation5 + $0x148] sm:$0xff]
        %v351 = vld [vmem:[#allocation5 + $0x150] sm:$0xff]
        %v352 = vld [vmem:[#allocation5 + $0x158] sm:$0xff]
        %v353 = vld [vmem:[#allocation5 + $0x160] sm:$0xff]
        %v354 = vld [vmem:[#allocation5 + $0x168] sm:$0xff]
        %v355 = vld [vmem:[#allocation5 + $0x170] sm:$0xff]
        %v356 = vld [vmem:[#allocation5 + $0x178] sm:$0xff]
        %v357 = vld [vmem:[#allocation7] sm:$0x1]
        %v359 = vlaneseq
        %v360 = vshrl.u32 %v359, 7
        %v361 = vsub.s32 0, %v360
        %v362 = vrot.slane %v357, %v361
        %364 = vmatprep.subr.mxu0 0.0
        %365 = vmatpush1.msra.mxu0 %v309
        %366 = vmatprep.subr.mxu0 0.0
        %367 = vmatpush1.msra.mxu0 %v310
        %368 = vmatprep.subr.mxu0 0.0
        %369 = vmatpush1.msra.mxu0 %v311
        %370 = vmatprep.subr.mxu0 0.0
        %371 = vmatpush1.msra.mxu0 %v312
        %372 = vmatprep.subr.mxu0 0.0
        %373 = vmatpush1.msra.mxu0 %v313
        %374 = vmatprep.subr.mxu0 0.0
        %375 = vmatpush1.msra.mxu0 %v314
        %376 = vmatprep.subr.mxu0 0.0
        %377 = vmatpush1.msra.mxu0 %v315
        %378 = vmatprep.subr.mxu0 0.0
        %379 = vmatpush1.msra.mxu0 %v316
        %380 = vmatprep.subr.mxu0 0.0
        %381 = vmatpush1.msra.mxu0 %v317
        %382 = vmatprep.subr.mxu0 0.0
        %383 = vmatpush1.msra.mxu0 %v318
        %384 = vmatprep.subr.mxu0 0.0
        %385 = vmatpush1.msra.mxu0 %v319
        %386 = vmatprep.subr.mxu0 0.0
        %387 = vmatpush1.msra.mxu0 %v320
        %388 = vmatprep.subr.mxu0 0.0
        %389 = vmatpush1.msra.mxu0 %v321
        %390 = vmatprep.subr.mxu0 0.0
        %391 = vmatpush1.msra.mxu0 %v322
        %392 = vmatprep.subr.mxu0 0.0
        %393 = vmatpush1.msra.mxu0 %v323
        %394 = vmatprep.subr.mxu0 0.0
        %395 = vmatpush1.msra.mxu0 %v324
        %396 = vmatprep.subr.mxu0 0.0
        %397 = vmatpush1.msra.mxu0 %v325
        %398 = vmatprep.subr.mxu0 0.0
        %399 = vmatpush1.msra.mxu0 %v326
        %400 = vmatprep.subr.mxu0 0.0
        %401 = vmatpush1.msra.mxu0 %v327
        %402 = vmatprep.subr.mxu0 0.0
        %403 = vmatpush1.msra.mxu0 %v328
        %404 = vmatprep.subr.mxu0 0.0
        %405 = vmatpush1.msra.mxu0 %v329
        %406 = vmatprep.subr.mxu0 0.0
        %407 = vmatpush1.msra.mxu0 %v330
        %408 = vmatprep.subr.mxu0 0.0
        %409 = vmatpush1.msra.mxu0 %v331
        %410 = vmatprep.subr.mxu0 0.0
        %411 = vmatpush1.msra.mxu0 %v332
        %412 = vmatprep.subr.mxu0 0.0
        %413 = vmatpush1.msra.mxu0 %v333
        %414 = vmatprep.subr.mxu0 0.0
        %415 = vmatpush1.msra.mxu0 %v334
        %416 = vmatprep.subr.mxu0 0.0
        %417 = vmatpush1.msra.mxu0 %v335
        %418 = vmatprep.subr.mxu0 0.0
        %419 = vmatpush1.msra.mxu0 %v336
        %420 = vmatprep.subr.mxu0 0.0
        %421 = vmatpush1.msra.mxu0 %v337
        %422 = vmatprep.subr.mxu0 0.0
        %423 = vmatpush1.msra.mxu0 %v338
        %424 = vmatprep.subr.mxu0 0.0
        %425 = vmatpush1.msra.mxu0 %v339
        %426 = vmatprep.subr.mxu0 0.0
        %427 = vmatpush1.msra.mxu0 %v340
        %428 = vmatprep.mubr.f32.mxu0 %v261
        %429 = vmatmul.mubr.f32.gmra.mrb[0].mxu0 %v261
        %v430 = vpop.f32.mrb[0].mxu0
        %v431 = vadd.f32 %v362, %v430
        %v432 = vpop.f32.mrb[0].mxu0
        %433 = vmatprep.mubr.f32.mxu0 %v262
        %434 = vmatmul.mubr.f32.gmra.mrb[0].mxu0 %v262
        %v435 = vpop.f32.mrb[0].mxu0
        %v436 = vadd.f32 %v362, %v435
        %v437 = vpop.f32.mrb[0].mxu0
        %438 = vmatprep.mubr.f32.mxu0 %v263
        %439 = vmatmul.mubr.f32.gmra.mrb[0].mxu0 %v263
        %v440 = vpop.f32.mrb[0].mxu0
        %v441 = vadd.f32 %v362, %v440
        %v442 = vpop.f32.mrb[0].mxu0
        %443 = vmatprep.mubr.f32.mxu0 %v264
        %444 = vmatmul.mubr.f32.gmra.mrb[0].mxu0 %v264
        %v445 = vpop.f32.mrb[0].mxu0
        %v446 = vadd.f32 %v362, %v445
        %v447 = vpop.f32.mrb[0].mxu0
        %448 = vmatprep.mubr.f32.mxu0 %v265
        %449 = vmatmul.mubr.f32.gmra.mrb[0].mxu0 %v265
        %v450 = vpop.f32.mrb[0].mxu0
        %v451 = vadd.f32 %v362, %v450
        %v452 = vpop.f32.mrb[0].mxu0
        %453 = vmatprep.mubr.f32.mxu0 %v266
        %454 = vmatmul.mubr.f32.gmra.mrb[0].mxu0 %v266
        %v455 = vpop.f32.mrb[0].mxu0
        %v456 = vadd.f32 %v362, %v455
        %v457 = vpop.f32.mrb[0].mxu0
        %458 = vmatprep.mubr.f32.mxu0 %v267
        %459 = vmatmul.mubr.f32.gmra.mrb[0].mxu0 %v267
        %v460 = vpop.f32.mrb[0].mxu0
        %v461 = vadd.f32 %v362, %v460
        %v462 = vpop.f32.mrb[0].mxu0
        %463 = vmatprep.mubr.f32.mxu0 %v268
        %464 = vmatmul.mubr.f32.gmra.mrb[0].mxu0 %v268
        %v465 = vpop.f32.mrb[0].mxu0
        %v466 = vadd.f32 %v362, %v465
        %v467 = vpop.f32.mrb[0].mxu0
        %468 = vmatprep.mubr.f32.mxu0 %v269
        %469 = vmatmul.mubr.f32.gmra.mrb[0].mxu0 %v269
        %v470 = vpop.f32.mrb[0].mxu0
        %v471 = vadd.f32 %v362, %v470
        %v472 = vpop.f32.mrb[0].mxu0
        %473 = vmatprep.mubr.f32.mxu0 %v270
        %474 = vmatmul.mubr.f32.gmra.mrb[0].mxu0 %v270
        %v475 = vpop.f32.mrb[0].mxu0
        %v476 = vadd.f32 %v362, %v475
        %v477 = vpop.f32.mrb[0].mxu0
        %478 = vmatprep.mubr.f32.mxu0 %v271
        %479 = vmatmul.mubr.f32.gmra.mrb[0].mxu0 %v271
        %v480 = vpop.f32.mrb[0].mxu0
        %v481 = vadd.f32 %v362, %v480
        %v482 = vpop.f32.mrb[0].mxu0
        %483 = vmatprep.mubr.f32.mxu0 %v272
        %484 = vmatmul.mubr.f32.gmra.mrb[0].mxu0 %v272
        %v485 = vpop.f32.mrb[0].mxu0
        %v486 = vadd.f32 %v362, %v485
        %v487 = vpop.f32.mrb[0].mxu0
        %488 = vmatprep.mubr.f32.mxu0 %v273
        %489 = vmatmul.mubr.f32.gmra.mrb[0].mxu0 %v273
        %v490 = vpop.f32.mrb[0].mxu0
        %v491 = vadd.f32 %v362, %v490
        %v492 = vpop.f32.mrb[0].mxu0
        %493 = vmatprep.mubr.f32.mxu0 %v274
        %494 = vmatmul.mubr.f32.gmra.mrb[0].mxu0 %v274
        %v495 = vpop.f32.mrb[0].mxu0
        %v496 = vadd.f32 %v362, %v495
        %v497 = vpop.f32.mrb[0].mxu0
        %498 = vmatprep.mubr.f32.mxu0 %v275
        %499 = vmatmul.mubr.f32.gmra.mrb[0].mxu0 %v275
        %v500 = vpop.f32.mrb[0].mxu0
        %v501 = vadd.f32 %v362, %v500
        %v502 = vpop.f32.mrb[0].mxu0
        %503 = vmatprep.mubr.f32.mxu0 %v276
        %504 = vmatmul.mubr.f32.gmra.mrb[0].mxu0 %v276
        %v505 = vpop.f32.mrb[0].mxu0
        %v506 = vadd.f32 %v362, %v505
        %v507 = vpop.f32.mrb[0].mxu0
        %508 = vmatprep.mubr.f32.mxu0 %v261
        %509 = vmatmul.mubr.f32.gmra.mrb[0].mxu0 %v261
        %v510 = vpop.f32.mrb[0].mxu0
        %v511 = vadd.f32 %v362, %v510
        %v512 = vpop.f32.mrb[0].mxu0
        %513 = vmatprep.mubr.f32.mxu0 %v262
        %514 = vmatmul.mubr.f32.gmra.mrb[0].mxu0 %v262
        %v515 = vpop.f32.mrb[0].mxu0
        %v516 = vadd.f32 %v362, %v515
        %v517 = vpop.f32.mrb[0].mxu0
        %518 = vmatprep.mubr.f32.mxu0 %v263
        %519 = vmatmul.mubr.f32.gmra.mrb[0].mxu0 %v263
        %v520 = vpop.f32.mrb[0].mxu0
        %v521 = vadd.f32 %v362, %v520
        %v522 = vpop.f32.mrb[0].mxu0
        %523 = vmatprep.mubr.f32.mxu0 %v264
        %524 = vmatmul.mubr.f32.gmra.mrb[0].mxu0 %v264
        %v525 = vpop.f32.mrb[0].mxu0
        %v526 = vadd.f32 %v362, %v525
        %v527 = vpop.f32.mrb[0].mxu0
        %528 = vmatprep.mubr.f32.mxu0 %v265
        %529 = vmatmul.mubr.f32.gmra.mrb[0].mxu0 %v265
        %v530 = vpop.f32.mrb[0].mxu0
        %v531 = vadd.f32 %v362, %v530
        %v532 = vpop.f32.mrb[0].mxu0
        %533 = vmatprep.mubr.f32.mxu0 %v266
        %534 = vmatmul.mubr.f32.gmra.mrb[0].mxu0 %v266
        %v535 = vpop.f32.mrb[0].mxu0
        %v536 = vadd.f32 %v362, %v535
        %v537 = vpop.f32.mrb[0].mxu0
        %538 = vmatprep.mubr.f32.mxu0 %v267
        %539 = vmatmul.mubr.f32.gmra.mrb[0].mxu0 %v267
        %v540 = vpop.f32.mrb[0].mxu0
        %v541 = vadd.f32 %v362, %v540
        %v542 = vpop.f32.mrb[0].mxu0
        %543 = vmatprep.mubr.f32.mxu0 %v268
        %544 = vmatmul.mubr.f32.gmra.mrb[0].mxu0 %v268
        %v545 = vpop.f32.mrb[0].mxu0
        %v546 = vadd.f32 %v362, %v545
        %v547 = vpop.f32.mrb[0].mxu0
        %548 = vmatprep.mubr.f32.mxu0 %v269
        %549 = vmatmul.mubr.f32.gmra.mrb[0].mxu0 %v269
        %v550 = vpop.f32.mrb[0].mxu0
        %v551 = vadd.f32 %v362, %v550
        %v552 = vpop.f32.mrb[0].mxu0
        %553 = vmatprep.mubr.f32.mxu0 %v270
        %554 = vmatmul.mubr.f32.gmra.mrb[0].mxu0 %v270
        %v555 = vpop.f32.mrb[0].mxu0
        %v556 = vadd.f32 %v362, %v555
        %v557 = vpop.f32.mrb[0].mxu0
        %558 = vmatprep.mubr.f32.mxu0 %v271
        %559 = vmatmul.mubr.f32.gmra.mrb[0].mxu0 %v271
        %v560 = vpop.f32.mrb[0].mxu0
        %v561 = vadd.f32 %v362, %v560
        %v562 = vpop.f32.mrb[0].mxu0
        %563 = vmatprep.mubr.f32.mxu0 %v272
        %564 = vmatmul.mubr.f32.gmra.mrb[0].mxu0 %v272
        %v565 = vpop.f32.mrb[0].mxu0
        %v566 = vadd.f32 %v362, %v565
        %v567 = vpop.f32.mrb[0].mxu0
        %568 = vmatprep.mubr.f32.mxu0 %v273
        %569 = vmatmul.mubr.f32.gmra.mrb[0].mxu0 %v273
        %v570 = vpop.f32.mrb[0].mxu0
        %v571 = vadd.f32 %v362, %v570
        %v572 = vpop.f32.mrb[0].mxu0
        %573 = vmatprep.mubr.f32.mxu0 %v274
        %574 = vmatmul.mubr.f32.gmra.mrb[0].mxu0 %v274
        %v575 = vpop.f32.mrb[0].mxu0
        %v576 = vadd.f32 %v362, %v575
        %v577 = vpop.f32.mrb[0].mxu0
        %578 = vmatprep.mubr.f32.mxu0 %v275
        %579 = vmatmul.mubr.f32.gmra.mrb[0].mxu0 %v275
        %v580 = vpop.f32.mrb[0].mxu0
        %v581 = vadd.f32 %v362, %v580
        %v582 = vpop.f32.mrb[0].mxu0
        %583 = vmatprep.mubr.f32.mxu0 %v276
        %584 = vmatmul.mubr.f32.gmra.mrb[0].mxu0 %v276
        %v585 = vpop.f32.mrb[0].mxu0
        %v586 = vadd.f32 %v362, %v585
        %v587 = vpop.f32.mrb[0].mxu0
        %588 = vmatprep.mubr.f32.mxu0 %v277
        %589 = vmatmul.mubr.f32.gmra.mrb[0].mxu0 %v261
        %v590 = vpop.f32.mrb[0].mxu0
        %v591 = vadd.f32 %v362, %v590
        %v592 = vpop.f32.mrb[0].mxu0
        %593 = vmatprep.mubr.f32.mxu0 %v278
        %594 = vmatmul.mubr.f32.gmra.mrb[0].mxu0 %v262
        %v595 = vpop.f32.mrb[0].mxu0
        %v596 = vadd.f32 %v362, %v595
        %v597 = vpop.f32.mrb[0].mxu0
        %598 = vmatprep.mubr.f32.mxu0 %v279
        %599 = vmatmul.mubr.f32.gmra.mrb[0].mxu0 %v263
        %v600 = vpop.f32.mrb[0].mxu0
        %v601 = vadd.f32 %v362, %v600
        %v602 = vpop.f32.mrb[0].mxu0
        %603 = vmatprep.mubr.f32.mxu0 %v280
        %604 = vmatmul.mubr.f32.gmra.mrb[0].mxu0 %v264
        %v605 = vpop.f32.mrb[0].mxu0
        %v606 = vadd.f32 %v362, %v605
        %v607 = vpop.f32.mrb[0].mxu0
        %608 = vmatprep.mubr.f32.mxu0 %v281
        %609 = vmatmul.mubr.f32.gmra.mrb[0].mxu0 %v265
        %v610 = vpop.f32.mrb[0].mxu0
        %v611 = vadd.f32 %v362, %v610
        %v612 = vpop.f32.mrb[0].mxu0
        %613 = vmatprep.mubr.f32.mxu0 %v282
        %614 = vmatmul.mubr.f32.gmra.mrb[0].mxu0 %v266
        %v615 = vpop.f32.mrb[0].mxu0
        %v616 = vadd.f32 %v362, %v615
        %v617 = vpop.f32.mrb[0].mxu0
        %618 = vmatprep.mubr.f32.mxu0 %v283
        %619 = vmatmul.mubr.f32.gmra.mrb[0].mxu0 %v267
        %v620 = vpop.f32.mrb[0].mxu0
        %v621 = vadd.f32 %v362, %v620
        %v622 = vpop.f32.mrb[0].mxu0
        %623 = vmatprep.mubr.f32.mxu0 %v284
        %624 = vmatmul.mubr.f32.gmra.mrb[0].mxu0 %v268
        %v625 = vpop.f32.mrb[0].mxu0
        %v626 = vadd.f32 %v362, %v625
        %v627 = vpop.f32.mrb[0].mxu0
        %628 = vmatprep.mubr.f32.mxu0 %v285
        %629 = vmatmul.mubr.f32.gmra.mrb[0].mxu0 %v269
        %v630 = vpop.f32.mrb[0].mxu0
        %v631 = vadd.f32 %v362, %v630
        %v632 = vpop.f32.mrb[0].mxu0
        %633 = vmatprep.mubr.f32.mxu0 %v286
        %634 = vmatmul.mubr.f32.gmra.mrb[0].mxu0 %v270
        %v635 = vpop.f32.mrb[0].mxu0
        %v636 = vadd.f32 %v362, %v635
        %v637 = vpop.f32.mrb[0].mxu0
        %638 = vmatprep.mubr.f32.mxu0 %v287
        %639 = vmatmul.mubr.f32.gmra.mrb[0].mxu0 %v271
        %v640 = vpop.f32.mrb[0].mxu0
        %v641 = vadd.f32 %v362, %v640
        %v642 = vpop.f32.mrb[0].mxu0
        %643 = vmatprep.mubr.f32.mxu0 %v288
        %644 = vmatmul.mubr.f32.gmra.mrb[0].mxu0 %v272
        %v645 = vpop.f32.mrb[0].mxu0
        %v646 = vadd.f32 %v362, %v645
        %v647 = vpop.f32.mrb[0].mxu0
        %648 = vmatprep.mubr.f32.mxu0 %v289
        %649 = vmatmul.mubr.f32.gmra.mrb[0].mxu0 %v273
        %v650 = vpop.f32.mrb[0].mxu0
        %v651 = vadd.f32 %v362, %v650
        %v652 = vpop.f32.mrb[0].mxu0
        %653 = vmatprep.mubr.f32.mxu0 %v290
        %654 = vmatmul.mubr.f32.gmra.mrb[0].mxu0 %v274
        %v655 = vpop.f32.mrb[0].mxu0
        %v656 = vadd.f32 %v362, %v655
        %v657 = vpop.f32.mrb[0].mxu0
        %658 = vmatprep.mubr.f32.mxu0 %v291
        %659 = vmatmul.mubr.f32.gmra.mrb[0].mxu0 %v275
        %v660 = vpop.f32.mrb[0].mxu0
        %v661 = vadd.f32 %v362, %v660
        %v662 = vpop.f32.mrb[0].mxu0
        %663 = vmatprep.mubr.f32.mxu0 %v292
        %664 = vmatmul.mubr.f32.gmra.mrb[0].mxu0 %v276
        %v665 = vpop.f32.mrb[0].mxu0
        %v666 = vadd.f32 %v362, %v665
        %v667 = vpop.f32.mrb[0].mxu0
        %668 = vmatprep.mubr.f32.mxu0 %v277
        %669 = vmatmul.mubr.f32.gmra.mrb[0].mxu0 %v277
        %v670 = vpop.f32.mrb[0].mxu0
        %v671 = vadd.f32 %v362, %v670
        %v672 = vpop.f32.mrb[0].mxu0
        %673 = vmatprep.mubr.f32.mxu0 %v278
        %674 = vmatmul.mubr.f32.gmra.mrb[0].mxu0 %v278
        %v675 = vpop.f32.mrb[0].mxu0
        %v676 = vadd.f32 %v362, %v675
        %v677 = vpop.f32.mrb[0].mxu0
        %678 = vmatprep.mubr.f32.mxu0 %v279
        %679 = vmatmul.mubr.f32.gmra.mrb[0].mxu0 %v279
        %v680 = vpop.f32.mrb[0].mxu0
        %v681 = vadd.f32 %v362, %v680
        %v682 = vpop.f32.mrb[0].mxu0
        %683 = vmatprep.mubr.f32.mxu0 %v280
        %684 = vmatmul.mubr.f32.gmra.mrb[0].mxu0 %v280
        %v685 = vpop.f32.mrb[0].mxu0
        %v686 = vadd.f32 %v362, %v685
        %v687 = vpop.f32.mrb[0].mxu0
        %688 = vmatprep.mubr.f32.mxu0 %v281
        %689 = vmatmul.mubr.f32.gmra.mrb[0].mxu0 %v281
        %v690 = vpop.f32.mrb[0].mxu0
        %v691 = vadd.f32 %v362, %v690
        %v692 = vpop.f32.mrb[0].mxu0
        %693 = vmatprep.mubr.f32.mxu0 %v282
        %694 = vmatmul.mubr.f32.gmra.mrb[0].mxu0 %v282
        %v695 = vpop.f32.mrb[0].mxu0
        %v696 = vadd.f32 %v362, %v695
        %v697 = vpop.f32.mrb[0].mxu0
        %698 = vmatprep.mubr.f32.mxu0 %v283
        %699 = vmatmul.mubr.f32.gmra.mrb[0].mxu0 %v283
        %v700 = vpop.f32.mrb[0].mxu0
        %v701 = vadd.f32 %v362, %v700
        %v702 = vpop.f32.mrb[0].mxu0
        %703 = vmatprep.mubr.f32.mxu0 %v284
        %704 = vmatmul.mubr.f32.gmra.mrb[0].mxu0 %v284
        %v705 = vpop.f32.mrb[0].mxu0
        %v706 = vadd.f32 %v362, %v705
        %v707 = vpop.f32.mrb[0].mxu0
        %708 = vmatprep.mubr.f32.mxu0 %v285
        %709 = vmatmul.mubr.f32.gmra.mrb[0].mxu0 %v285
        %v710 = vpop.f32.mrb[0].mxu0
        %v711 = vadd.f32 %v362, %v710
        %v712 = vpop.f32.mrb[0].mxu0
        %713 = vmatprep.mubr.f32.mxu0 %v286
        %714 = vmatmul.mubr.f32.gmra.mrb[0].mxu0 %v286
        %v715 = vpop.f32.mrb[0].mxu0
        %v716 = vadd.f32 %v362, %v715
        %v717 = vpop.f32.mrb[0].mxu0
        %718 = vmatprep.mubr.f32.mxu0 %v287
        %719 = vmatmul.mubr.f32.gmra.mrb[0].mxu0 %v287
        %v720 = vpop.f32.mrb[0].mxu0
        %v721 = vadd.f32 %v362, %v720
        %v722 = vpop.f32.mrb[0].mxu0
        %723 = vmatprep.mubr.f32.mxu0 %v288
        %724 = vmatmul.mubr.f32.gmra.mrb[0].mxu0 %v288
        %v725 = vpop.f32.mrb[0].mxu0
        %v726 = vadd.f32 %v362, %v725
        %v727 = vpop.f32.mrb[0].mxu0
        %728 = vmatprep.mubr.f32.mxu0 %v289
        %729 = vmatmul.mubr.f32.gmra.mrb[0].mxu0 %v289
        %v730 = vpop.f32.mrb[0].mxu0
        %v731 = vadd.f32 %v362, %v730
        %v732 = vpop.f32.mrb[0].mxu0
        %733 = vmatprep.mubr.f32.mxu0 %v290
        %734 = vmatmul.mubr.f32.gmra.mrb[0].mxu0 %v290
        %v735 = vpop.f32.mrb[0].mxu0
        %v736 = vadd.f32 %v362, %v735
        %v737 = vpop.f32.mrb[0].mxu0
        %738 = vmatprep.mubr.f32.mxu0 %v291
        %739 = vmatmul.mubr.f32.gmra.mrb[0].mxu0 %v291
        %v740 = vpop.f32.mrb[0].mxu0
        %v741 = vadd.f32 %v362, %v740
        %v742 = vpop.f32.mrb[0].mxu0
        %743 = vmatprep.mubr.f32.mxu0 %v292
        %744 = vmatmul.mubr.f32.gmra.mrb[0].mxu0 %v292
        %v745 = vpop.f32.mrb[0].mxu0
        %v746 = vadd.f32 %v362, %v745
        %v747 = vpop.f32.mrb[0].mxu0
        %748 = vmatprep.mubr.f32.mxu0 %v293
        %749 = vmatmul.mubr.f32.gmra.mrb[0].mxu0 %v277
        %v750 = vpop.f32.mrb[0].mxu0
        %v751 = vadd.f32 %v362, %v750
        %v752 = vpop.f32.mrb[0].mxu0
        %753 = vmatprep.mubr.f32.mxu0 %v294
        %754 = vmatmul.mubr.f32.gmra.mrb[0].mxu0 %v278
        %v755 = vpop.f32.mrb[0].mxu0
        %v756 = vadd.f32 %v362, %v755
        %v757 = vpop.f32.mrb[0].mxu0
        %758 = vmatprep.mubr.f32.mxu0 %v295
        %759 = vmatmul.mubr.f32.gmra.mrb[0].mxu0 %v279
        %v760 = vpop.f32.mrb[0].mxu0
        %v761 = vadd.f32 %v362, %v760
        %v762 = vpop.f32.mrb[0].mxu0
        %763 = vmatprep.mubr.f32.mxu0 %v296
        %764 = vmatmul.mubr.f32.gmra.mrb[0].mxu0 %v280
        %v765 = vpop.f32.mrb[0].mxu0
        %v766 = vadd.f32 %v362, %v765
        %v767 = vpop.f32.mrb[0].mxu0
        %768 = vmatprep.mubr.f32.mxu0 %v297
        %769 = vmatmul.mubr.f32.gmra.mrb[0].mxu0 %v281
        %v770 = vpop.f32.mrb[0].mxu0
        %v771 = vadd.f32 %v362, %v770
        %v772 = vpop.f32.mrb[0].mxu0
        %773 = vmatprep.mubr.f32.mxu0 %v298
        %774 = vmatmul.mubr.f32.gmra.mrb[0].mxu0 %v282
        %v775 = vpop.f32.mrb[0].mxu0
        %v776 = vadd.f32 %v362, %v775
        %v777 = vpop.f32.mrb[0].mxu0
        %778 = vmatprep.mubr.f32.mxu0 %v299
        %779 = vmatmul.mubr.f32.gmra.mrb[0].mxu0 %v283
        %v780 = vpop.f32.mrb[0].mxu0
        %v781 = vadd.f32 %v362, %v780
        %v782 = vpop.f32.mrb[0].mxu0
        %783 = vmatprep.mubr.f32.mxu0 %v300
        %784 = vmatmul.mubr.f32.gmra.mrb[0].mxu0 %v284
        %v785 = vpop.f32.mrb[0].mxu0
        %v786 = vadd.f32 %v362, %v785
        %v787 = vpop.f32.mrb[0].mxu0
        %788 = vmatprep.mubr.f32.mxu0 %v301
        %789 = vmatmul.mubr.f32.gmra.mrb[0].mxu0 %v285
        %v790 = vpop.f32.mrb[0].mxu0
        %v791 = vadd.f32 %v362, %v790
        %v792 = vpop.f32.mrb[0].mxu0
        %793 = vmatprep.mubr.f32.mxu0 %v302
        %794 = vmatmul.mubr.f32.gmra.mrb[0].mxu0 %v286
        %v795 = vpop.f32.mrb[0].mxu0
        %v796 = vadd.f32 %v362, %v795
        %v797 = vpop.f32.mrb[0].mxu0
        %798 = vmatprep.mubr.f32.mxu0 %v303
        %799 = vmatmul.mubr.f32.gmra.mrb[0].mxu0 %v287
        %v800 = vpop.f32.mrb[0].mxu0
        %v801 = vadd.f32 %v362, %v800
        %v802 = vpop.f32.mrb[0].mxu0
        %803 = vmatprep.mubr.f32.mxu0 %v304
        %804 = vmatmul.mubr.f32.gmra.mrb[0].mxu0 %v288
        %v805 = vpop.f32.mrb[0].mxu0
        %v806 = vadd.f32 %v362, %v805
        %v807 = vpop.f32.mrb[0].mxu0
        %808 = vmatprep.mubr.f32.mxu0 %v305
        %809 = vmatmul.mubr.f32.gmra.mrb[0].mxu0 %v289
        %v810 = vpop.f32.mrb[0].mxu0
        %v811 = vadd.f32 %v362, %v810
        %v812 = vpop.f32.mrb[0].mxu0
        %813 = vmatprep.mubr.f32.mxu0 %v306
        %814 = vmatmul.mubr.f32.gmra.mrb[0].mxu0 %v290
        %v815 = vpop.f32.mrb[0].mxu0
        %v816 = vadd.f32 %v362, %v815
        %v817 = vpop.f32.mrb[0].mxu0
        %818 = vmatprep.mubr.f32.mxu0 %v307
        %819 = vmatmul.mubr.f32.gmra.mrb[0].mxu0 %v291
        %v820 = vpop.f32.mrb[0].mxu0
        %v821 = vadd.f32 %v362, %v820
        %v822 = vpop.f32.mrb[0].mxu0
        %823 = vmatprep.mubr.f32.mxu0 %v308
        %824 = vmatmul.mubr.f32.gmra.mrb[0].mxu0 %v292
        %v825 = vpop.f32.mrb[0].mxu0
        %v826 = vadd.f32 %v362, %v825
        %v827 = vpop.f32.mrb[0].mxu0
        %828 = vdwg.mxu0
        %829 = vmatprep.subr.mxu0 0.0
        %830 = vmatpush1.msra.mxu0 %v341
        %831 = vmatprep.subr.mxu0 0.0
        %832 = vmatpush1.msra.mxu0 %v342
        %833 = vmatprep.subr.mxu0 0.0
        %834 = vmatpush1.msra.mxu0 %v343
        %835 = vmatprep.subr.mxu0 0.0
        %836 = vmatpush1.msra.mxu0 %v344
        %837 = vmatprep.subr.mxu0 0.0
        %838 = vmatpush1.msra.mxu0 %v345
        %839 = vmatprep.subr.mxu0 0.0
        %840 = vmatpush1.msra.mxu0 %v346
        %841 = vmatprep.subr.mxu0 0.0
        %842 = vmatpush1.msra.mxu0 %v347
        %843 = vmatprep.subr.mxu0 0.0
        %844 = vmatpush1.msra.mxu0 %v348
        %845 = vmatprep.subr.mxu0 0.0
        %846 = vmatpush1.msra.mxu0 %v349
        %847 = vmatprep.subr.mxu0 0.0
        %848 = vmatpush1.msra.mxu0 %v350
        %849 = vmatprep.subr.mxu0 0.0
        %850 = vmatpush1.msra.mxu0 %v351
        %851 = vmatprep.subr.mxu0 0.0
        %852 = vmatpush1.msra.mxu0 %v352
        %853 = vmatprep.subr.mxu0 0.0
        %854 = vmatpush1.msra.mxu0 %v353
        %855 = vmatprep.subr.mxu0 0.0
        %856 = vmatpush1.msra.mxu0 %v354
        %857 = vmatprep.subr.mxu0 0.0
        %858 = vmatpush1.msra.mxu0 %v355
        %859 = vmatprep.subr.mxu0 0.0
        %860 = vmatpush1.msra.mxu0 %v356
        %861 = vmatprep.subr.mxu0 0.0
        %862 = vmatpush1.msra.mxu0 0.0
        %863 = vmatprep.subr.mxu0 0.0
        %864 = vmatpush1.msra.mxu0 0.0
        %865 = vmatprep.subr.mxu0 0.0
        %866 = vmatpush1.msra.mxu0 0.0
        %867 = vmatprep.subr.mxu0 0.0
        %868 = vmatpush1.msra.mxu0 0.0
        %869 = vmatprep.subr.mxu0 0.0
        %870 = vmatpush1.msra.mxu0 0.0
        %871 = vmatprep.subr.mxu0 0.0
        %872 = vmatpush1.msra.mxu0 0.0
        %873 = vmatprep.subr.mxu0 0.0
        %874 = vmatpush1.msra.mxu0 0.0
        %875 = vmatprep.subr.mxu0 0.0
        %876 = vmatpush1.msra.mxu0 0.0
        %877 = vmatprep.subr.mxu0 0.0
        %878 = vmatpush1.msra.mxu0 0.0
        %879 = vmatprep.subr.mxu0 0.0
        %880 = vmatpush1.msra.mxu0 0.0
        %881 = vmatprep.subr.mxu0 0.0
        %882 = vmatpush1.msra.mxu0 0.0
        %883 = vmatprep.subr.mxu0 0.0
        %884 = vmatpush1.msra.mxu0 0.0
        %885 = vmatprep.subr.mxu0 0.0
        %886 = vmatpush1.msra.mxu0 0.0
        %887 = vmatprep.subr.mxu0 0.0
        %888 = vmatpush1.msra.mxu0 0.0
        %889 = vmatprep.subr.mxu0 0.0
        %890 = vmatpush1.msra.mxu0 0.0
        %891 = vmatprep.subr.mxu0 0.0
        %892 = vmatpush1.msra.mxu0 0.0
        %893 = vmatprep.mubr.f32.mxu0 0.0
        %894 = vmatmul.mubr.f32.gmra.mrb[0].mxu0 %v261
        %v895 = vpop.f32.mrb[0].mxu0
        %v896 = vadd.f32 %v431, %v895
        %v897 = vpop.f32.mrb[0].mxu0
        %898 = vmatprep.mubr.f32.mxu0 0.0
        %899 = vmatmul.mubr.f32.gmra.mrb[0].mxu0 %v262
        %v900 = vpop.f32.mrb[0].mxu0
        %v901 = vadd.f32 %v436, %v900
        %v902 = vpop.f32.mrb[0].mxu0
        %903 = vmatprep.mubr.f32.mxu0 0.0
        %904 = vmatmul.mubr.f32.gmra.mrb[0].mxu0 %v263
        %v905 = vpop.f32.mrb[0].mxu0
        %v906 = vadd.f32 %v441, %v905
        %v907 = vpop.f32.mrb[0].mxu0
        %908 = vmatprep.mubr.f32.mxu0 0.0
        %909 = vmatmul.mubr.f32.gmra.mrb[0].mxu0 %v264
        %v910 = vpop.f32.mrb[0].mxu0
        %v911 = vadd.f32 %v446, %v910
        %v912 = vpop.f32.mrb[0].mxu0
        %913 = vmatprep.mubr.f32.mxu0 0.0
        %914 = vmatmul.mubr.f32.gmra.mrb[0].mxu0 %v265
        %v915 = vpop.f32.mrb[0].mxu0
        %v916 = vadd.f32 %v451, %v915
        %v917 = vpop.f32.mrb[0].mxu0
        %918 = vmatprep.mubr.f32.mxu0 0.0
        %919 = vmatmul.mubr.f32.gmra.mrb[0].mxu0 %v266
        %v920 = vpop.f32.mrb[0].mxu0
        %v921 = vadd.f32 %v456, %v920
        %v922 = vpop.f32.mrb[0].mxu0
        %923 = vmatprep.mubr.f32.mxu0 0.0
        %924 = vmatmul.mubr.f32.gmra.mrb[0].mxu0 %v267
        %v925 = vpop.f32.mrb[0].mxu0
        %v926 = vadd.f32 %v461, %v925
        %v927 = vpop.f32.mrb[0].mxu0
        %928 = vmatprep.mubr.f32.mxu0 0.0
        %929 = vmatmul.mubr.f32.gmra.mrb[0].mxu0 %v268
        %v930 = vpop.f32.mrb[0].mxu0
        %v931 = vadd.f32 %v466, %v930
        %v932 = vpop.f32.mrb[0].mxu0
        %933 = vmatprep.mubr.f32.mxu0 0.0
        %934 = vmatmul.mubr.f32.gmra.mrb[0].mxu0 %v269
        %v935 = vpop.f32.mrb[0].mxu0
        %v936 = vadd.f32 %v471, %v935
        %v937 = vpop.f32.mrb[0].mxu0
        %938 = vmatprep.mubr.f32.mxu0 0.0
        %939 = vmatmul.mubr.f32.gmra.mrb[0].mxu0 %v270
        %v940 = vpop.f32.mrb[0].mxu0
        %v941 = vadd.f32 %v476, %v940
        %v942 = vpop.f32.mrb[0].mxu0
        %943 = vmatprep.mubr.f32.mxu0 0.0
        %944 = vmatmul.mubr.f32.gmra.mrb[0].mxu0 %v271
        %v945 = vpop.f32.mrb[0].mxu0
        %v946 = vadd.f32 %v481, %v945
        %v947 = vpop.f32.mrb[0].mxu0
        %948 = vmatprep.mubr.f32.mxu0 0.0
        %949 = vmatmul.mubr.f32.gmra.mrb[0].mxu0 %v272
        %v950 = vpop.f32.mrb[0].mxu0
        %v951 = vadd.f32 %v486, %v950
        %v952 = vpop.f32.mrb[0].mxu0
        %953 = vmatprep.mubr.f32.mxu0 0.0
        %954 = vmatmul.mubr.f32.gmra.mrb[0].mxu0 %v273
        %v955 = vpop.f32.mrb[0].mxu0
        %v956 = vadd.f32 %v491, %v955
        %v957 = vpop.f32.mrb[0].mxu0
        %958 = vmatprep.mubr.f32.mxu0 0.0
        %959 = vmatmul.mubr.f32.gmra.mrb[0].mxu0 %v274
        %v960 = vpop.f32.mrb[0].mxu0
        %v961 = vadd.f32 %v496, %v960
        %v962 = vpop.f32.mrb[0].mxu0
        %963 = vmatprep.mubr.f32.mxu0 0.0
        %964 = vmatmul.mubr.f32.gmra.mrb[0].mxu0 %v275
        %v965 = vpop.f32.mrb[0].mxu0
        %v966 = vadd.f32 %v501, %v965
        %v967 = vpop.f32.mrb[0].mxu0
        %968 = vmatprep.mubr.f32.mxu0 0.0
        %969 = vmatmul.mubr.f32.gmra.mrb[0].mxu0 %v276
        %v970 = vpop.f32.mrb[0].mxu0
        %v971 = vadd.f32 %v506, %v970
        %v972 = vpop.f32.mrb[0].mxu0
        %973 = vmatprep.mubr.f32.mxu0 0.0
        %974 = vmatmul.mubr.f32.gmra.mrb[0].mxu0 %v277
        %v975 = vpop.f32.mrb[0].mxu0
        %v976 = vadd.f32 %v511, %v975
        %v977 = vpop.f32.mrb[0].mxu0
        %978 = vmatprep.mubr.f32.mxu0 0.0
        %979 = vmatmul.mubr.f32.gmra.mrb[0].mxu0 %v278
        %v980 = vpop.f32.mrb[0].mxu0
        %v981 = vadd.f32 %v516, %v980
        %v982 = vpop.f32.mrb[0].mxu0
        %983 = vmatprep.mubr.f32.mxu0 0.0
        %984 = vmatmul.mubr.f32.gmra.mrb[0].mxu0 %v279
        %v985 = vpop.f32.mrb[0].mxu0
        %v986 = vadd.f32 %v521, %v985
        %v987 = vpop.f32.mrb[0].mxu0
        %988 = vmatprep.mubr.f32.mxu0 0.0
        %989 = vmatmul.mubr.f32.gmra.mrb[0].mxu0 %v280
        %v990 = vpop.f32.mrb[0].mxu0
        %v991 = vadd.f32 %v526, %v990
        %v992 = vpop.f32.mrb[0].mxu0
        %993 = vmatprep.mubr.f32.mxu0 0.0
        %994 = vmatmul.mubr.f32.gmra.mrb[0].mxu0 %v281
        %v995 = vpop.f32.mrb[0].mxu0
        %v996 = vadd.f32 %v531, %v995
        %v997 = vpop.f32.mrb[0].mxu0
        %998 = vmatprep.mubr.f32.mxu0 0.0
        %999 = vmatmul.mubr.f32.gmra.mrb[0].mxu0 %v282
        %v1000 = vpop.f32.mrb[0].mxu0
        %v1001 = vadd.f32 %v536, %v1000
        %v1002 = vpop.f32.mrb[0].mxu0
        %1003 = vmatprep.mubr.f32.mxu0 0.0
        %1004 = vmatmul.mubr.f32.gmra.mrb[0].mxu0 %v283
        %v1005 = vpop.f32.mrb[0].mxu0
        %v1006 = vadd.f32 %v541, %v1005
        %v1007 = vpop.f32.mrb[0].mxu0
        %1008 = vmatprep.mubr.f32.mxu0 0.0
        %1009 = vmatmul.mubr.f32.gmra.mrb[0].mxu0 %v284
        %v1010 = vpop.f32.mrb[0].mxu0
        %v1011 = vadd.f32 %v546, %v1010
        %v1012 = vpop.f32.mrb[0].mxu0
        %1013 = vmatprep.mubr.f32.mxu0 0.0
        %1014 = vmatmul.mubr.f32.gmra.mrb[0].mxu0 %v285
        %v1015 = vpop.f32.mrb[0].mxu0
        %v1016 = vadd.f32 %v551, %v1015
        %v1017 = vpop.f32.mrb[0].mxu0
        %1018 = vmatprep.mubr.f32.mxu0 0.0
        %1019 = vmatmul.mubr.f32.gmra.mrb[0].mxu0 %v286
        %v1020 = vpop.f32.mrb[0].mxu0
        %v1021 = vadd.f32 %v556, %v1020
        %v1022 = vpop.f32.mrb[0].mxu0
        %1023 = vmatprep.mubr.f32.mxu0 0.0
        %1024 = vmatmul.mubr.f32.gmra.mrb[0].mxu0 %v287
        %v1025 = vpop.f32.mrb[0].mxu0
        %v1026 = vadd.f32 %v561, %v1025
        %v1027 = vpop.f32.mrb[0].mxu0
        %1028 = vmatprep.mubr.f32.mxu0 0.0
        %1029 = vmatmul.mubr.f32.gmra.mrb[0].mxu0 %v288
        %v1030 = vpop.f32.mrb[0].mxu0
        %v1031 = vadd.f32 %v566, %v1030
        %v1032 = vpop.f32.mrb[0].mxu0
        %1033 = vmatprep.mubr.f32.mxu0 0.0
        %1034 = vmatmul.mubr.f32.gmra.mrb[0].mxu0 %v289
        %v1035 = vpop.f32.mrb[0].mxu0
        %v1036 = vadd.f32 %v571, %v1035
        %v1037 = vpop.f32.mrb[0].mxu0
        %1038 = vmatprep.mubr.f32.mxu0 0.0
        %1039 = vmatmul.mubr.f32.gmra.mrb[0].mxu0 %v290
        %v1040 = vpop.f32.mrb[0].mxu0
        %v1041 = vadd.f32 %v576, %v1040
        %v1042 = vpop.f32.mrb[0].mxu0
        %1043 = vmatprep.mubr.f32.mxu0 0.0
        %1044 = vmatmul.mubr.f32.gmra.mrb[0].mxu0 %v291
        %v1045 = vpop.f32.mrb[0].mxu0
        %v1046 = vadd.f32 %v581, %v1045
        %v1047 = vpop.f32.mrb[0].mxu0
        %1048 = vmatprep.mubr.f32.mxu0 0.0
        %1049 = vmatmul.mubr.f32.gmra.mrb[0].mxu0 %v292
        %v1050 = vpop.f32.mrb[0].mxu0
        %v1051 = vadd.f32 %v586, %v1050
        %v1052 = vpop.f32.mrb[0].mxu0
        %1053 = vmatprep.mubr.f32.mxu0 0.0
        %1054 = vmatmul.mubr.f32.gmra.mrb[0].mxu0 %v277
        %v1055 = vpop.f32.mrb[0].mxu0
        %v1056 = vadd.f32 %v591, %v1055
        %v1057 = vpop.f32.mrb[0].mxu0
        %1058 = vmatprep.mubr.f32.mxu0 0.0
        %1059 = vmatmul.mubr.f32.gmra.mrb[0].mxu0 %v278
        %v1060 = vpop.f32.mrb[0].mxu0
        %v1061 = vadd.f32 %v596, %v1060
        %v1062 = vpop.f32.mrb[0].mxu0
        %1063 = vmatprep.mubr.f32.mxu0 0.0
        %1064 = vmatmul.mubr.f32.gmra.mrb[0].mxu0 %v279
        %v1065 = vpop.f32.mrb[0].mxu0
        %v1066 = vadd.f32 %v601, %v1065
        %v1067 = vpop.f32.mrb[0].mxu0
        %1068 = vmatprep.mubr.f32.mxu0 0.0
        %1069 = vmatmul.mubr.f32.gmra.mrb[0].mxu0 %v280
        %v1070 = vpop.f32.mrb[0].mxu0
        %v1071 = vadd.f32 %v606, %v1070
        %v1072 = vpop.f32.mrb[0].mxu0
        %1073 = vmatprep.mubr.f32.mxu0 0.0
        %1074 = vmatmul.mubr.f32.gmra.mrb[0].mxu0 %v281
        %v1075 = vpop.f32.mrb[0].mxu0
        %v1076 = vadd.f32 %v611, %v1075
        %v1077 = vpop.f32.mrb[0].mxu0
        %1078 = vmatprep.mubr.f32.mxu0 0.0
        %1079 = vmatmul.mubr.f32.gmra.mrb[0].mxu0 %v282
        %v1080 = vpop.f32.mrb[0].mxu0
        %v1081 = vadd.f32 %v616, %v1080
        %v1082 = vpop.f32.mrb[0].mxu0
        %1083 = vmatprep.mubr.f32.mxu0 0.0
        %1084 = vmatmul.mubr.f32.gmra.mrb[0].mxu0 %v283
        %v1085 = vpop.f32.mrb[0].mxu0
        %v1086 = vadd.f32 %v621, %v1085
        %v1087 = vpop.f32.mrb[0].mxu0
        %1088 = vmatprep.mubr.f32.mxu0 0.0
        %1089 = vmatmul.mubr.f32.gmra.mrb[0].mxu0 %v284
        %v1090 = vpop.f32.mrb[0].mxu0
        %v1091 = vadd.f32 %v626, %v1090
        %v1092 = vpop.f32.mrb[0].mxu0
        %1093 = vmatprep.mubr.f32.mxu0 0.0
        %1094 = vmatmul.mubr.f32.gmra.mrb[0].mxu0 %v285
        %v1095 = vpop.f32.mrb[0].mxu0
        %v1096 = vadd.f32 %v631, %v1095
        %v1097 = vpop.f32.mrb[0].mxu0
        %1098 = vmatprep.mubr.f32.mxu0 0.0
        %1099 = vmatmul.mubr.f32.gmra.mrb[0].mxu0 %v286
        %v1100 = vpop.f32.mrb[0].mxu0
        %v1101 = vadd.f32 %v636, %v1100
        %v1102 = vpop.f32.mrb[0].mxu0
        %1103 = vmatprep.mubr.f32.mxu0 0.0
        %1104 = vmatmul.mubr.f32.gmra.mrb[0].mxu0 %v287
        %v1105 = vpop.f32.mrb[0].mxu0
        %v1106 = vadd.f32 %v641, %v1105
        %v1107 = vpop.f32.mrb[0].mxu0
        %1108 = vmatprep.mubr.f32.mxu0 0.0
        %1109 = vmatmul.mubr.f32.gmra.mrb[0].mxu0 %v288
        %v1110 = vpop.f32.mrb[0].mxu0
        %v1111 = vadd.f32 %v646, %v1110
        %v1112 = vpop.f32.mrb[0].mxu0
        %1113 = vmatprep.mubr.f32.mxu0 0.0
        %1114 = vmatmul.mubr.f32.gmra.mrb[0].mxu0 %v289
        %v1115 = vpop.f32.mrb[0].mxu0
        %v1116 = vadd.f32 %v651, %v1115
        %v1117 = vpop.f32.mrb[0].mxu0
        %1118 = vmatprep.mubr.f32.mxu0 0.0
        %1119 = vmatmul.mubr.f32.gmra.mrb[0].mxu0 %v290
        %v1120 = vpop.f32.mrb[0].mxu0
        %v1121 = vadd.f32 %v656, %v1120
        %v1122 = vpop.f32.mrb[0].mxu0
        %1123 = vmatprep.mubr.f32.mxu0 0.0
        %1124 = vmatmul.mubr.f32.gmra.mrb[0].mxu0 %v291
        %v1125 = vpop.f32.mrb[0].mxu0
        %v1126 = vadd.f32 %v661, %v1125
        %v1127 = vpop.f32.mrb[0].mxu0
        %1128 = vmatprep.mubr.f32.mxu0 0.0
        %1129 = vmatmul.mubr.f32.gmra.mrb[0].mxu0 %v292
        %v1130 = vpop.f32.mrb[0].mxu0
        %v1131 = vadd.f32 %v666, %v1130
        %v1132 = vpop.f32.mrb[0].mxu0
        %1133 = vmatprep.mubr.f32.mxu0 0.0
        %1134 = vmatmul.mubr.f32.gmra.mrb[0].mxu0 %v293
        %v1135 = vpop.f32.mrb[0].mxu0
        %v1136 = vadd.f32 %v671, %v1135
        %v1137 = vpop.f32.mrb[0].mxu0
        %1138 = vmatprep.mubr.f32.mxu0 0.0
        %1139 = vmatmul.mubr.f32.gmra.mrb[0].mxu0 %v294
        %v1140 = vpop.f32.mrb[0].mxu0
        %v1141 = vadd.f32 %v676, %v1140
        %v1142 = vpop.f32.mrb[0].mxu0
        %1143 = vmatprep.mubr.f32.mxu0 0.0
        %1144 = vmatmul.mubr.f32.gmra.mrb[0].mxu0 %v295
        %v1145 = vpop.f32.mrb[0].mxu0
        %v1146 = vadd.f32 %v681, %v1145
        %v1147 = vpop.f32.mrb[0].mxu0
        %1148 = vmatprep.mubr.f32.mxu0 0.0
        %1149 = vmatmul.mubr.f32.gmra.mrb[0].mxu0 %v296
        %v1150 = vpop.f32.mrb[0].mxu0
        %v1151 = vadd.f32 %v686, %v1150
        %v1152 = vpop.f32.mrb[0].mxu0
        %1153 = vmatprep.mubr.f32.mxu0 0.0
        %1154 = vmatmul.mubr.f32.gmra.mrb[0].mxu0 %v297
        %v1155 = vpop.f32.mrb[0].mxu0
        %v1156 = vadd.f32 %v691, %v1155
        %v1157 = vpop.f32.mrb[0].mxu0
        %1158 = vmatprep.mubr.f32.mxu0 0.0
        %1159 = vmatmul.mubr.f32.gmra.mrb[0].mxu0 %v298
        %v1160 = vpop.f32.mrb[0].mxu0
        %v1161 = vadd.f32 %v696, %v1160
        %v1162 = vpop.f32.mrb[0].mxu0
        %1163 = vmatprep.mubr.f32.mxu0 0.0
        %1164 = vmatmul.mubr.f32.gmra.mrb[0].mxu0 %v299
        %v1165 = vpop.f32.mrb[0].mxu0
        %v1166 = vadd.f32 %v701, %v1165
        %v1167 = vpop.f32.mrb[0].mxu0
        %1168 = vmatprep.mubr.f32.mxu0 0.0
        %1169 = vmatmul.mubr.f32.gmra.mrb[0].mxu0 %v300
        %v1170 = vpop.f32.mrb[0].mxu0
        %v1171 = vadd.f32 %v706, %v1170
        %v1172 = vpop.f32.mrb[0].mxu0
        %1173 = vmatprep.mubr.f32.mxu0 0.0
        %1174 = vmatmul.mubr.f32.gmra.mrb[0].mxu0 %v301
        %v1175 = vpop.f32.mrb[0].mxu0
        %v1176 = vadd.f32 %v711, %v1175
        %v1177 = vpop.f32.mrb[0].mxu0
        %1178 = vmatprep.mubr.f32.mxu0 0.0
        %1179 = vmatmul.mubr.f32.gmra.mrb[0].mxu0 %v302
        %v1180 = vpop.f32.mrb[0].mxu0
        %v1181 = vadd.f32 %v716, %v1180
        %v1182 = vpop.f32.mrb[0].mxu0
        %1183 = vmatprep.mubr.f32.mxu0 0.0
        %1184 = vmatmul.mubr.f32.gmra.mrb[0].mxu0 %v303
        %v1185 = vpop.f32.mrb[0].mxu0
        %v1186 = vadd.f32 %v721, %v1185
        %v1187 = vpop.f32.mrb[0].mxu0
        %1188 = vmatprep.mubr.f32.mxu0 0.0
        %1189 = vmatmul.mubr.f32.gmra.mrb[0].mxu0 %v304
        %v1190 = vpop.f32.mrb[0].mxu0
        %v1191 = vadd.f32 %v726, %v1190
        %v1192 = vpop.f32.mrb[0].mxu0
        %1193 = vmatprep.mubr.f32.mxu0 0.0
        %1194 = vmatmul.mubr.f32.gmra.mrb[0].mxu0 %v305
        %v1195 = vpop.f32.mrb[0].mxu0
        %v1196 = vadd.f32 %v731, %v1195
        %v1197 = vpop.f32.mrb[0].mxu0
        %1198 = vmatprep.mubr.f32.mxu0 0.0
        %1199 = vmatmul.mubr.f32.gmra.mrb[0].mxu0 %v306
        %v1200 = vpop.f32.mrb[0].mxu0
        %v1201 = vadd.f32 %v736, %v1200
        %v1202 = vpop.f32.mrb[0].mxu0
        %1203 = vmatprep.mubr.f32.mxu0 0.0
        %1204 = vmatmul.mubr.f32.gmra.mrb[0].mxu0 %v307
        %v1205 = vpop.f32.mrb[0].mxu0
        %v1206 = vadd.f32 %v741, %v1205
        %v1207 = vpop.f32.mrb[0].mxu0
        %1208 = vmatprep.mubr.f32.mxu0 0.0
        %1209 = vmatmul.mubr.f32.gmra.mrb[0].mxu0 %v308
        %v1210 = vpop.f32.mrb[0].mxu0
        %v1211 = vadd.f32 %v746, %v1210
        %v1212 = vpop.f32.mrb[0].mxu0
        %1213 = vmatprep.mubr.f32.mxu0 0.0
        %1214 = vmatmul.mubr.f32.gmra.mrb[0].mxu0 %v293
        %v1215 = vpop.f32.mrb[0].mxu0
        %v1216 = vadd.f32 %v751, %v1215
        %v1217 = vpop.f32.mrb[0].mxu0
        %1218 = vmatprep.mubr.f32.mxu0 0.0
        %1219 = vmatmul.mubr.f32.gmra.mrb[0].mxu0 %v294
        %v1220 = vpop.f32.mrb[0].mxu0
        %v1221 = vadd.f32 %v756, %v1220
        %v1222 = vpop.f32.mrb[0].mxu0
        %1223 = vmatprep.mubr.f32.mxu0 0.0
        %1224 = vmatmul.mubr.f32.gmra.mrb[0].mxu0 %v295
        %v1225 = vpop.f32.mrb[0].mxu0
        %v1226 = vadd.f32 %v761, %v1225
        %v1227 = vpop.f32.mrb[0].mxu0
        %1228 = vmatprep.mubr.f32.mxu0 0.0
        %1229 = vmatmul.mubr.f32.gmra.mrb[0].mxu0 %v296
        %v1230 = vpop.f32.mrb[0].mxu0
        %v1231 = vadd.f32 %v766, %v1230
        %v1232 = vpop.f32.mrb[0].mxu0
        %1233 = vmatprep.mubr.f32.mxu0 0.0
        %1234 = vmatmul.mubr.f32.gmra.mrb[0].mxu0 %v297
        %v1235 = vpop.f32.mrb[0].mxu0
        %v1236 = vadd.f32 %v771, %v1235
        %v1237 = vpop.f32.mrb[0].mxu0
        %1238 = vmatprep.mubr.f32.mxu0 0.0
        %1239 = vmatmul.mubr.f32.gmra.mrb[0].mxu0 %v298
        %v1240 = vpop.f32.mrb[0].mxu0
        %v1241 = vadd.f32 %v776, %v1240
        %v1242 = vpop.f32.mrb[0].mxu0
        %1243 = vmatprep.mubr.f32.mxu0 0.0
        %1244 = vmatmul.mubr.f32.gmra.mrb[0].mxu0 %v299
        %v1245 = vpop.f32.mrb[0].mxu0
        %v1246 = vadd.f32 %v781, %v1245
        %v1247 = vpop.f32.mrb[0].mxu0
        %1248 = vmatprep.mubr.f32.mxu0 0.0
        %1249 = vmatmul.mubr.f32.gmra.mrb[0].mxu0 %v300
        %v1250 = vpop.f32.mrb[0].mxu0
        %v1251 = vadd.f32 %v786, %v1250
        %v1252 = vpop.f32.mrb[0].mxu0
        %1253 = vmatprep.mubr.f32.mxu0 0.0
        %1254 = vmatmul.mubr.f32.gmra.mrb[0].mxu0 %v301
        %v1255 = vpop.f32.mrb[0].mxu0
        %v1256 = vadd.f32 %v791, %v1255
        %v1257 = vpop.f32.mrb[0].mxu0
        %1258 = vmatprep.mubr.f32.mxu0 0.0
        %1259 = vmatmul.mubr.f32.gmra.mrb[0].mxu0 %v302
        %v1260 = vpop.f32.mrb[0].mxu0
        %v1261 = vadd.f32 %v796, %v1260
        %v1262 = vpop.f32.mrb[0].mxu0
        %1263 = vmatprep.mubr.f32.mxu0 0.0
        %1264 = vmatmul.mubr.f32.gmra.mrb[0].mxu0 %v303
        %v1265 = vpop.f32.mrb[0].mxu0
        %v1266 = vadd.f32 %v801, %v1265
        %v1267 = vpop.f32.mrb[0].mxu0
        %1268 = vmatprep.mubr.f32.mxu0 0.0
        %1269 = vmatmul.mubr.f32.gmra.mrb[0].mxu0 %v304
        %v1270 = vpop.f32.mrb[0].mxu0
        %v1271 = vadd.f32 %v806, %v1270
        %v1272 = vpop.f32.mrb[0].mxu0
        %1273 = vmatprep.mubr.f32.mxu0 0.0
        %1274 = vmatmul.mubr.f32.gmra.mrb[0].mxu0 %v305
        %v1275 = vpop.f32.mrb[0].mxu0
        %v1276 = vadd.f32 %v811, %v1275
        %v1277 = vpop.f32.mrb[0].mxu0
        %1278 = vmatprep.mubr.f32.mxu0 0.0
        %1279 = vmatmul.mubr.f32.gmra.mrb[0].mxu0 %v306
        %v1280 = vpop.f32.mrb[0].mxu0
        %v1281 = vadd.f32 %v816, %v1280
        %v1282 = vpop.f32.mrb[0].mxu0
        %1283 = vmatprep.mubr.f32.mxu0 0.0
        %1284 = vmatmul.mubr.f32.gmra.mrb[0].mxu0 %v307
        %v1285 = vpop.f32.mrb[0].mxu0
        %v1286 = vadd.f32 %v821, %v1285
        %v1287 = vpop.f32.mrb[0].mxu0
        %1288 = vmatprep.mubr.f32.mxu0 0.0
        %1289 = vmatmul.mubr.f32.gmra.mrb[0].mxu0 %v308
        %v1290 = vpop.f32.mrb[0].mxu0
        %v1291 = vadd.f32 %v826, %v1290
        %v1292 = vpop.f32.mrb[0].mxu0
        %1293 = vdwg.mxu0
        %v1294 = vadd.f32 %v896, %v261
        %v1295 = vadd.f32 %v901, %v262
        %v1296 = vadd.f32 %v906, %v263
        %v1297 = vadd.f32 %v911, %v264
        %v1298 = vadd.f32 %v916, %v265
        %v1299 = vadd.f32 %v921, %v266
        %v1300 = vadd.f32 %v926, %v267
        %v1301 = vadd.f32 %v931, %v268
        %v1302 = vadd.f32 %v936, %v269
        %v1303 = vadd.f32 %v941, %v270
        %v1304 = vadd.f32 %v946, %v271
        %v1305 = vadd.f32 %v951, %v272
        %v1306 = vadd.f32 %v956, %v273
        %v1307 = vadd.f32 %v961, %v274
        %v1308 = vadd.f32 %v966, %v275
        %v1309 = vadd.f32 %v971, %v276
        %v1310 = vadd.f32 %v976, %v277
        %v1311 = vadd.f32 %v981, %v278
        %v1312 = vadd.f32 %v986, %v279
        %v1313 = vadd.f32 %v991, %v280
        %v1314 = vadd.f32 %v996, %v281
        %v1315 = vadd.f32 %v1001, %v282
        %v1316 = vadd.f32 %v1006, %v283
        %v1317 = vadd.f32 %v1011, %v284
        %v1318 = vadd.f32 %v1016, %v285
        %v1319 = vadd.f32 %v1021, %v286
        %v1320 = vadd.f32 %v1026, %v287
        %v1321 = vadd.f32 %v1031, %v288
        %v1322 = vadd.f32 %v1036, %v289
        %v1323 = vadd.f32 %v1041, %v290
        %v1324 = vadd.f32 %v1046, %v291
        %v1325 = vadd.f32 %v1051, %v292
        %v1326 = vadd.f32 %v1056, %v277
        %v1327 = vadd.f32 %v1061, %v278
        %v1328 = vadd.f32 %v1066, %v279
        %v1329 = vadd.f32 %v1071, %v280
        %v1330 = vadd.f32 %v1076, %v281
        %v1331 = vadd.f32 %v1081, %v282
        %v1332 = vadd.f32 %v1086, %v283
        %v1333 = vadd.f32 %v1091, %v284
        %v1334 = vadd.f32 %v1096, %v285
        %v1335 = vadd.f32 %v1101, %v286
        %v1336 = vadd.f32 %v1106, %v287
        %v1337 = vadd.f32 %v1111, %v288
        %v1338 = vadd.f32 %v1116, %v289
        %v1339 = vadd.f32 %v1121, %v290
        %v1340 = vadd.f32 %v1126, %v291
        %v1341 = vadd.f32 %v1131, %v292
        %v1342 = vadd.f32 %v1136, %v293
        %v1343 = vadd.f32 %v1141, %v294
        %v1344 = vadd.f32 %v1146, %v295
        %v1345 = vadd.f32 %v1151, %v296
        %v1346 = vadd.f32 %v1156, %v297
        %v1347 = vadd.f32 %v1161, %v298
        %v1348 = vadd.f32 %v1166, %v299
        %v1349 = vadd.f32 %v1171, %v300
        %v1350 = vadd.f32 %v1176, %v301
        %v1351 = vadd.f32 %v1181, %v302
        %v1352 = vadd.f32 %v1186, %v303
        %v1353 = vadd.f32 %v1191, %v304
        %v1354 = vadd.f32 %v1196, %v305
        %v1355 = vadd.f32 %v1201, %v306
        %v1356 = vadd.f32 %v1206, %v307
        %v1357 = vadd.f32 %v1211, %v308
        %v1358 = vadd.f32 %v1216, %v293
        %v1359 = vadd.f32 %v1221, %v294
        %v1360 = vadd.f32 %v1226, %v295
        %v1361 = vadd.f32 %v1231, %v296
        %v1362 = vadd.f32 %v1236, %v297
        %v1363 = vadd.f32 %v1241, %v298
        %v1364 = vadd.f32 %v1246, %v299
        %v1365 = vadd.f32 %v1251, %v300
        %v1366 = vadd.f32 %v1256, %v301
        %v1367 = vadd.f32 %v1261, %v302
        %v1368 = vadd.f32 %v1266, %v303
        %v1369 = vadd.f32 %v1271, %v304
        %v1370 = vadd.f32 %v1276, %v305
        %v1371 = vadd.f32 %v1281, %v306
        %v1372 = vadd.f32 %v1286, %v307
        %v1373 = vadd.f32 %v1291, %v308
        %1374 = vst [vmem:[%s258] sm:$0xff] %v1294
        %1375 = vst [vmem:[%s258 + $0x8] sm:$0xff] %v1295
        %1376 = vst [vmem:[%s258 + $0x10] sm:$0xff] %v1296
        %1377 = vst [vmem:[%s258 + $0x18] sm:$0xff] %v1297
        %1378 = vst [vmem:[%s258 + $0x20] sm:$0xff] %v1298
        %1379 = vst [vmem:[%s258 + $0x28] sm:$0xff] %v1299
        %1380 = vst [vmem:[%s258 + $0x30] sm:$0xff] %v1300
        %1381 = vst [vmem:[%s258 + $0x38] sm:$0xff] %v1301
        %1382 = vst [vmem:[%s258 + $0x40] sm:$0xff] %v1302
        %1383 = vst [vmem:[%s258 + $0x48] sm:$0xff] %v1303
        %1384 = vst [vmem:[%s258 + $0x50] sm:$0xff] %v1304
        %1385 = vst [vmem:[%s258 + $0x58] sm:$0xff] %v1305
        %1386 = vst [vmem:[%s258 + $0x60] sm:$0xff] %v1306
        %1387 = vst [vmem:[%s258 + $0x68] sm:$0xff] %v1307
        %1388 = vst [vmem:[%s258 + $0x70] sm:$0xff] %v1308
        %1389 = vst [vmem:[%s258 + $0x78] sm:$0xff] %v1309
        %1390 = vst [vmem:[%s258 + $0x80] sm:$0xff] %v1310
        %1391 = vst [vmem:[%s258 + $0x88] sm:$0xff] %v1311
        %1392 = vst [vmem:[%s258 + $0x90] sm:$0xff] %v1312
        %1393 = vst [vmem:[%s258 + $0x98] sm:$0xff] %v1313
        %1394 = vst [vmem:[%s258 + $0xa0] sm:$0xff] %v1314
        %1395 = vst [vmem:[%s258 + $0xa8] sm:$0xff] %v1315
        %1396 = vst [vmem:[%s258 + $0xb0] sm:$0xff] %v1316
        %1397 = vst [vmem:[%s258 + $0xb8] sm:$0xff] %v1317
        %1398 = vst [vmem:[%s258 + $0xc0] sm:$0xff] %v1318
        %1399 = vst [vmem:[%s258 + $0xc8] sm:$0xff] %v1319
        %1400 = vst [vmem:[%s258 + $0xd0] sm:$0xff] %v1320
        %1401 = vst [vmem:[%s258 + $0xd8] sm:$0xff] %v1321
        %1402 = vst [vmem:[%s258 + $0xe0] sm:$0xff] %v1322
        %1403 = vst [vmem:[%s258 + $0xe8] sm:$0xff] %v1323
        %1404 = vst [vmem:[%s258 + $0xf0] sm:$0xff] %v1324
        %1405 = vst [vmem:[%s258 + $0xf8] sm:$0xff] %v1325
        %1406 = vst [vmem:[%s258 + $0x100] sm:$0xff] %v1326
        %1407 = vst [vmem:[%s258 + $0x108] sm:$0xff] %v1327
        %1408 = vst [vmem:[%s258 + $0x110] sm:$0xff] %v1328
        %1409 = vst [vmem:[%s258 + $0x118] sm:$0xff] %v1329
        %1410 = vst [vmem:[%s258 + $0x120] sm:$0xff] %v1330
        %1411 = vst [vmem:[%s258 + $0x128] sm:$0xff] %v1331
        %1412 = vst [vmem:[%s258 + $0x130] sm:$0xff] %v1332
        %1413 = vst [vmem:[%s258 + $0x138] sm:$0xff] %v1333
        %1414 = vst [vmem:[%s258 + $0x140] sm:$0xff] %v1334
        %1415 = vst [vmem:[%s258 + $0x148] sm:$0xff] %v1335
        %1416 = vst [vmem:[%s258 + $0x150] sm:$0xff] %v1336
        %1417 = vst [vmem:[%s258 + $0x158] sm:$0xff] %v1337
        %1418 = vst [vmem:[%s258 + $0x160] sm:$0xff] %v1338
        %1419 = vst [vmem:[%s258 + $0x168] sm:$0xff] %v1339
        %1420 = vst [vmem:[%s258 + $0x170] sm:$0xff] %v1340
        %1421 = vst [vmem:[%s258 + $0x178] sm:$0xff] %v1341
        %1422 = vst [vmem:[%s258 + $0x180] sm:$0xff] %v1342
        %1423 = vst [vmem:[%s258 + $0x188] sm:$0xff] %v1343
        %1424 = vst [vmem:[%s258 + $0x190] sm:$0xff] %v1344
        %1425 = vst [vmem:[%s258 + $0x198] sm:$0xff] %v1345
        %1426 = vst [vmem:[%s258 + $0x1a0] sm:$0xff] %v1346
        %1427 = vst [vmem:[%s258 + $0x1a8] sm:$0xff] %v1347
        %1428 = vst [vmem:[%s258 + $0x1b0] sm:$0xff] %v1348
        %1429 = vst [vmem:[%s258 + $0x1b8] sm:$0xff] %v1349
        %1430 = vst [vmem:[%s258 + $0x1c0] sm:$0xff] %v1350
        %1431 = vst [vmem:[%s258 + $0x1c8] sm:$0xff] %v1351
        %1432 = vst [vmem:[%s258 + $0x1d0] sm:$0xff] %v1352
        %1433 = vst [vmem:[%s258 + $0x1d8] sm:$0xff] %v1353
        %1434 = vst [vmem:[%s258 + $0x1e0] sm:$0xff] %v1354
        %1435 = vst [vmem:[%s258 + $0x1e8] sm:$0xff] %v1355
        %1436 = vst [vmem:[%s258 + $0x1f0] sm:$0xff] %v1356
        %1437 = vst [vmem:[%s258 + $0x1f8] sm:$0xff] %v1357
        %1438 = vst [vmem:[%s258 + $0x200] sm:$0xff] %v1358
        %1439 = vst [vmem:[%s258 + $0x208] sm:$0xff] %v1359
        %1440 = vst [vmem:[%s258 + $0x210] sm:$0xff] %v1360
        %1441 = vst [vmem:[%s258 + $0x218] sm:$0xff] %v1361
        %1442 = vst [vmem:[%s258 + $0x220] sm:$0xff] %v1362
        %1443 = vst [vmem:[%s258 + $0x228] sm:$0xff] %v1363
        %1444 = vst [vmem:[%s258 + $0x230] sm:$0xff] %v1364
        %1445 = vst [vmem:[%s258 + $0x238] sm:$0xff] %v1365
        %1446 = vst [vmem:[%s258 + $0x240] sm:$0xff] %v1366
        %1447 = vst [vmem:[%s258 + $0x248] sm:$0xff] %v1367
        %1448 = vst [vmem:[%s258 + $0x250] sm:$0xff] %v1368
        %1449 = vst [vmem:[%s258 + $0x258] sm:$0xff] %v1369
        %1450 = vst [vmem:[%s258 + $0x260] sm:$0xff] %v1370
        %1451 = vst [vmem:[%s258 + $0x268] sm:$0xff] %v1371
        %1452 = vst [vmem:[%s258 + $0x270] sm:$0xff] %v1372
        %1453 = vst [vmem:[%s258 + $0x278] sm:$0xff] %v1373
        %s1454 = sand.u32 %s113, 1
        %s1455 = scalar_lea.sflag [#allocation4], %s1454
        %s1456 = sand.u32 %s113, 1
        %s1457 = smul.addr %s1456, 640
        %s1458 = scalar_lea.vmem [#allocation8], %s1457
        // Predicated region
        $region45: #{tpu_custom_call.1} parent=31 // pred_check
          %p1459 = pneg %p123
        $region46: #{tpu_custom_call.1} parent=31 // pred_check_branch
          %1461 = sbr.rel (%p1459) target = $region48
        $region47: #{tpu_custom_call.1} parent=31 // pred_region
          #allocation12 [shape = 'u32[6]{0}', space=smem, size = 0x18, scoped, tag = 'DMA stride descriptor']
          %s1462 = smul.u32 16, %s26
          %s1464 = ssub.s32 10240, 10240
          %1465 = vsyncadd %s1455, %s1464
          %s1466 = smul.addr %s25, 160
          %s1467 = sadd.s32 %s1462, %s1466
          %s1468 = smul.addr %s1467, 128
          %s1469 = scalar_lea.hbm %s3, %s1468
          %s1471 = sshll.u32 1, 14
          %s1472 = sxor.u32 4294967295, %s1471
          %s1475 = sshll.u32 7, 18
          %s1476 = sxor.u32 4294967295, %s1475
          %s1477 = sand.u32 0, %s1476
          %s1479 = sor.u32 %s1477, 0
          %s1481 = sshll.u32 3, 24
          %s1482 = sxor.u32 4294967295, %s1481
          %s1483 = sand.u32 %s1479, %s1482
          %s1485 = sor.u32 %s1483, 0
          %s1486 = sshll.u32 %s1458, 4
          %s1487 = int_to_ptr.vmem [resolvable:$true] %s1486
          %1493 = sst [smem:[#allocation12]] 2048
          %s1494 = scalar_lea.smem [#allocation12], 1
          %1495 = sst [smem:[%s1494]] 4096
          %s1496 = scalar_lea.smem [#allocation12], 2
          %1497 = sst [smem:[%s1496]] 16
          %s1498 = scalar_lea.smem [#allocation12], 3
          %1499 = sst [smem:[%s1498]] 128
          %s1500 = scalar_lea.smem [#allocation12], 4
          %1501 = sst [smem:[%s1500]] 128
          %s1502 = scalar_lea.smem [#allocation12], 5
          %1503 = sst [smem:[%s1502]] 8
          %1505 = dma.general %s1487, 10240, %s1469, %s1455, [#allocation11], [#allocation12], %s1485, 0
        $region48: #{tpu_custom_call.1} parent=31 // pred_fallthru
          _
      $region32: #{tpu_custom_call.1} parent=5 // pred_fallthru
        _
      %p1506 = scmp.le.s32.totalorder 2, %s16
      // Predicated region
      $region49: #{tpu_custom_call.1} parent=5 // pred_check
        %p1507 = pneg %p1506
      $region50: #{tpu_custom_call.1} parent=5 // pred_check_branch
        %1509 = sbr.rel (%p1507) target = $region52
      $region51: #{tpu_custom_call.1} parent=5 // pred_region
        %s1510 = ssub.s32 %s16, 2
        // Predicated region
        $region53: #{tpu_custom_call.1} parent=51 // pred_check
          %p1511 = pneg %p129
        $region54: #{tpu_custom_call.1} parent=51 // pred_check_branch
          %1513 = sbr.rel (%p1511) target = $region56
        $region55: #{tpu_custom_call.1} parent=51 // pred_region
          %s1514 = sand.u32 %s114, 1
          %s1515 = scalar_lea.sflag [#allocation4], %s1514
          %s1516 = sand.u32 %s114, 1
          %s1517 = smul.addr %s1516, 640
          %s1518 = scalar_lea.vmem [#allocation8], %s1517
          %1519 = dma.done %s1515, 10240
        $region56: #{tpu_custom_call.1} parent=51 // pred_fallthru
          _
      $region52: #{tpu_custom_call.1} parent=5 // pred_fallthru
        _
    $region6: #{tpu_custom_call.1} parent=1 // loop_footer
      %s20 = sadd.s32 1, %s16
    $region7: #{tpu_custom_call.1} parent=1 // loop_footer_branch
      %15 = sbr.rel target = $region3
    $region8: #{tpu_custom_call.1} parent=1 // loop_exit
      _
    %1520 = vsyncpa [#allocation3], 1
    %s1521 = scalar_lea.sflag [#allocation3], 1
    %1522 = vsyncpa %s1521, 1
    %1523 = vsyncpa [#allocation6], 1
    %1524 = vsyncpa [#allocation4], 1
    %s1525 = scalar_lea.sflag [#allocation4], 1
    %1526 = vsyncpa %s1525, 1

</llo_original>
